<compile_context>
chip_gen: v6e
topology: v6e:2x2x1
jax: 0.10.0
libtpu: 0.0.40
codegen_flags: <defaults>
</compile_context>

<pallas_src>
import functools

import jax
import jax.numpy as jnp
from jax.experimental import pallas as pl
from jax.experimental.pallas import tpu as pltpu


# ----------------------------------------------------------------------------
# Pallas kernel: tiled (patches @ W) with f32 accumulator, fused epilogue
#   epilogue = * scale + bias  [+ residual]  [ReLU]
# ----------------------------------------------------------------------------
def _fused_matmul_kernel(has_res, apply_relu, *refs):
    if has_res:
        p_ref, w_ref, s_ref, b_ref, r_ref, o_ref, acc_ref = refs
    else:
        p_ref, w_ref, s_ref, b_ref, o_ref, acc_ref = refs
        r_ref = None

    k = pl.program_id(1)

    @pl.when(k == 0)
    def _():
        acc_ref[...] = jnp.zeros_like(acc_ref)

    # bf16 x bf16 -> f32 accumulation on the MXU.
    acc_ref[...] += jnp.dot(p_ref[...], w_ref[...],
                            preferred_element_type=jnp.float32)

    @pl.when(k == pl.num_programs(1) - 1)
    def _():
        acc = acc_ref[...] * s_ref[...] + b_ref[...]   # folded BatchNorm (f32)
        if has_res:
            acc = acc + r_ref[...]                     # residual add (f32)
        if apply_relu:
            acc = jnp.maximum(acc, 0.0)
        o_ref[...] = acc.astype(o_ref.dtype)


def _round_up(x, m):
    return (x + m - 1) // m * m


def _pad2d(a, rows, cols):
    r, c = a.shape
    if r == rows and c == cols:
        return a
    return jnp.pad(a, ((0, rows - r), (0, cols - c)))


def fused_conv_matmul(patches, w_mat, scale, bias, residual=None, relu=True,
                      out_dtype=jnp.float32):
    """patches: (M, K), w_mat: (K, Cout), scale/bias: (1, Cout),
    residual: (M, Cout) or None.  Returns (M, Cout) in `out_dtype`."""
    M, K = patches.shape
    Cout = w_mat.shape[1]
    has_res = residual is not None

    # --- tile selection (lane-dense, (8,128)-aligned, VMEM-friendly) --------
    m_full = _round_up(M, 8)
    TM = m_full if m_full <= 512 else 256          # rows per M tile
    Mp = _round_up(M, TM)

    k_full = _round_up(K, 128)
    TK = k_full if k_full <= 1024 else 512         # reduction tile
    Kp = _round_up(K, TK)

    Cp = _round_up(Cout, 128)                      # lane-dense output channels

    # --- pad + cast inputs (bf16 operands for the MXU, f32 epilogue terms) --
    p = _pad2d(patches.astype(jnp.bfloat16), Mp, Kp)
    w = _pad2d(w_mat.astype(jnp.bfloat16), Kp, Cp)
    s = _pad2d(scale.astype(jnp.float32), 1, Cp)
    b = _pad2d(bias.astype(jnp.float32), 1, Cp)

    inputs = [p, w, s, b]
    in_specs = [
        pl.BlockSpec((TM, TK), lambda i, k: (i, k)),     # streaming patches
        pl.BlockSpec((TK, Cp), lambda i, k: (k, 0)),     # weights (M-invariant)
        pl.BlockSpec((1, Cp), lambda i, k: (0, 0)),      # scale: fetched once
        pl.BlockSpec((1, Cp), lambda i, k: (0, 0)),      # bias:  fetched once
    ]
    if has_res:
        r = _pad2d(residual.astype(jnp.float32), Mp, Cp)
        inputs.append(r)
        in_specs.append(pl.BlockSpec((TM, Cp), lambda i, k: (i, 0)))

    out_spec = pl.BlockSpec((TM, Cp), lambda i, k: (i, 0))
    grid = (Mp // TM, Kp // TK)

    out_itemsize = jnp.dtype(out_dtype).itemsize
    bytes_accessed = (p.size * 2 + w.size * 2 + s.size * 4 + b.size * 4
                      + (r.size * 4 if has_res else 0) + Mp * Cp * out_itemsize)

    kernel = functools.partial(_fused_matmul_kernel, has_res, relu)
    out = pl.pallas_call(
        kernel,
        out_shape=jax.ShapeDtypeStruct((Mp, Cp), out_dtype),
        grid=grid,
        in_specs=in_specs,
        out_specs=out_spec,
        scratch_shapes=[pltpu.VMEM((TM, Cp), jnp.float32)],
        compiler_params=pltpu.CompilerParams(
            # M tiles shard across TensorCores (v7x megacore); K (reduction)
            # stays last and sequential for the accumulator.
            dimension_semantics=("parallel", "arbitrary"),
            vmem_limit_bytes=48 * 1024 * 1024,
        ),
        cost_estimate=pl.CostEstimate(
            flops=2 * Mp * Kp * Cp,
            transcendentals=0,
            bytes_accessed=bytes_accessed,
        ),
    )(*inputs)
    return out[:M, :Cout]


# ----------------------------------------------------------------------------
# Plain-JAX glue: im2col patch extraction (NHWC), one-time parameter prep
# ----------------------------------------------------------------------------
def im2col(x_nhwc, kh, kw, stride, padding):
    N, H, W, C = x_nhwc.shape
    xp = jnp.pad(x_nhwc, ((0, 0), (padding, padding), (padding, padding), (0, 0)))
    OH = (H + 2 * padding - kh) // stride + 1
    OW = (W + 2 * padding - kw) // stride + 1
    cols = []
    for i in range(kh):
        for j in range(kw):
            cols.append(xp[:, i:i + stride * OH:stride, j:j + stride * OW:stride, :])
    patches = jnp.concatenate(cols, axis=-1)          # (N, OH, OW, kh*kw*C)
    return patches.reshape(N * OH * OW, kh * kw * C), (N, OH, OW)


def fold_bn(gamma, beta, mean, var, eps=1e-5):
    scale = gamma.astype(jnp.float32) / jnp.sqrt(var.astype(jnp.float32) + eps)
    bias = beta.astype(jnp.float32) - mean.astype(jnp.float32) * scale
    return scale.reshape(1, -1), bias.reshape(1, -1)


def conv_weight_to_mat(w_oihw):
    # PyTorch conv weight (Cout, Cin, KH, KW) -> (KH*KW*Cin, Cout), matching
    # the im2col column order (kh-major, kw, then channel).  bf16 for the MXU.
    return (jnp.transpose(w_oihw, (2, 3, 1, 0))
            .reshape(-1, w_oihw.shape[0]).astype(jnp.bfloat16))


def prepare_block_params(raw):
    """Hoisted one-time prep: folded BN constants + matmul-ready weights."""
    prepared = {
        "w1": conv_weight_to_mat(raw["w1"]), "sb1": fold_bn(*raw["bn1"]),
        "w2": conv_weight_to_mat(raw["w2"]), "sb2": fold_bn(*raw["bn2"]),
    }
    if "wd" in raw:
        prepared["wd"] = conv_weight_to_mat(raw["wd"])
        prepared["sbd"] = fold_bn(*raw["bnd"])
    return prepared


# ----------------------------------------------------------------------------
# BasicBlock forward (inference semantics of the PyTorch module)
# ----------------------------------------------------------------------------
def basic_block_forward(x_nchw, params, *, stride=2, downsample=1, Res=0,
                        islast=False):
    # NCHW -> NHWC; bf16 activations feed the MXU (accumulation stays f32).
    x = jnp.transpose(x_nchw, (0, 2, 3, 1)).astype(jnp.bfloat16)
    Cout = params["w1"].shape[1]

    # conv1: 3x3 stride=s, pad=1 -> BN -> ReLU   (bf16 out: feeds conv2's MXU)
    p1, (N, OH, OW) = im2col(x, 3, 3, stride, 1)
    s1, b1 = params["sb1"]
    h1 = fused_conv_matmul(p1, params["w1"], s1, b1, relu=True,
                           out_dtype=jnp.bfloat16)
    h1_nhwc = h1.reshape(N, OH, OW, Cout)

    # optional residual path: 1x1 stride=s conv -> BN (no relu), or identity
    residual = None
    if Res == 1:
        if downsample == 1:
            pd, _ = im2col(x, 1, 1, stride, 0)
            sd, bd = params["sbd"]
            residual = fused_conv_matmul(pd, params["wd"], sd, bd, relu=False,
                                         out_dtype=jnp.float32)
        else:
            if stride != 1 or x.shape[-1] != Cout:
                raise ValueError(
                    "Identity shortcut requires stride=1 and inplanes==out_planes "
                    "(same constraint as the PyTorch module's `out += x`).")
            residual = x.reshape(-1, Cout).astype(jnp.float32)

    # conv2: 3x3 stride=1, pad=1 -> BN [+ residual] [ReLU if not islast]
    p2, _ = im2col(h1_nhwc, 3, 3, 1, 1)
    s2, b2 = params["sb2"]
    out = fused_conv_matmul(p2, params["w2"], s2, b2, residual=residual,
                            relu=not islast, out_dtype=jnp.float32)

    out_nhwc = out.reshape(N, OH, OW, Cout)
    return jnp.transpose(out_nhwc, (0, 3, 1, 2))      # back to NCHW


# ----------------------------------------------------------------------------
# Deterministic parameter init (PyTorch-layout raw params)
# ----------------------------------------------------------------------------
def init_params(key, inplanes, out_planes):
    ks = jax.random.split(key, 16)

    def bn(k):
        k1, k2, k3, k4 = jax.random.split(k, 4)
        gamma = jax.random.uniform(k1, (out_planes,), minval=0.5, maxval=1.5)
        beta = jax.random.normal(k2, (out_planes,)) * 0.1
        mean = jax.random.normal(k3, (out_planes,)) * 0.1
        var = jax.random.uniform(k4, (out_planes,), minval=0.5, maxval=1.5)
        return gamma, beta, mean, var

    return {
        "w1": jax.random.normal(ks[0], (out_planes, inplanes, 3, 3)) * 0.1,
        "bn1": bn(ks[1]),
        "w2": jax.random.normal(ks[2], (out_planes, out_planes, 3, 3)) * 0.1,
        "bn2": bn(ks[3]),
        "wd": jax.random.normal(ks[4], (out_planes, inplanes, 1, 1)) * 0.1,
        "bnd": bn(ks[5]),
    }


if __name__ == "__main__":
    key = jax.random.PRNGKey(0)
    k_x, k_p = jax.random.split(key)

    N, Cin, H, W = 2, 4, 16, 16
    Cout = 8
    x = jax.random.normal(k_x, (N, Cin, H, W), dtype=jnp.float32)
    raw_params = init_params(k_p, Cin, Cout)
    params = prepare_block_params(raw_params)          # one-time prep (hoisted)

    # Exercise the full block: stride-2, 1x1 downsample, residual, final ReLU.
    fwd_res = jax.jit(functools.partial(
        basic_block_forward, stride=2, downsample=1, Res=1, islast=False))
    out = jax.block_until_ready(fwd_res(x, params))
    assert out.shape == (N, Cout, H // 2, W // 2), out.shape

    # Also run the default configuration (Res=0 -> no residual path, ReLU).
    fwd_plain = jax.jit(functools.partial(
        basic_block_forward, stride=2, downsample=1, Res=0, islast=False))
    out_default = jax.block_until_ready(fwd_plain(x, params))
    assert out_default.shape == (N, Cout, H // 2, W // 2), out_default.shape

    print("KERNEL_OK")
</pallas_src>

<mosaic_0001>
module attributes {stable_mosaic.version = 11 : i64} {
  func.func @_fused_matmul_kernel(%arg0: i32, %arg1: i32, %arg2: memref<128x128xbf16, #tpu.memory_space<vmem>>, %arg3: memref<128x128xbf16, #tpu.memory_space<vmem>>, %arg4: memref<1x128xf32, #tpu.memory_space<vmem>>, %arg5: memref<1x128xf32, #tpu.memory_space<vmem>>, %arg6: memref<128x128xbf16, #tpu.memory_space<vmem>>, %arg7: memref<128x128xf32, #tpu.memory_space<vmem>>) attributes {dimension_semantics = [#tpu.dimension_semantics<parallel>, #tpu.dimension_semantics<arbitrary>], iteration_bounds = array<i64: 1, 1>, scalar_prefetch = 0 : i64, scratch_operands = 1 : i64, tpu.core_type = #tpu.core_type<tc>, window_params = [{transform_indices = @transform_0, window_bounds = array<i64: 128, 128>}, {transform_indices = @transform_1, window_bounds = array<i64: 128, 128>}, {pipeline_mode = #tpu.pipeline_mode<synchronous>, transform_indices = @transform_2, window_bounds = array<i64: 1, 128>}, {pipeline_mode = #tpu.pipeline_mode<synchronous>, transform_indices = @transform_3, window_bounds = array<i64: 1, 128>}, {transform_indices = @transform_4, window_bounds = array<i64: 128, 128>}]} {
    %c0_i32 = arith.constant 0 : i32
    %0 = arith.cmpi eq, %arg1, %c0_i32 : i32
    %1 = arith.extui %0 : i1 to i32
    %c0_i32_0 = arith.constant 0 : i32
    %2 = arith.cmpi ne, %1, %c0_i32_0 : i32
    scf.if %2 {
      %cst_10 = arith.constant 0.000000e+00 : f32
      %12 = vector.broadcast %cst_10 : f32 to vector<128x128xf32>
      %c0_11 = arith.constant 0 : index
      %c0_12 = arith.constant 0 : index
      %13 = vector.load %arg7[%c0_11, %c0_12] : memref<128x128xf32, #tpu.memory_space<vmem>>, vector<128x128xf32>
      tpu.vector_store %arg7[%c0_11, %c0_12], %12 {strides = array<i32>} : memref<128x128xf32, #tpu.memory_space<vmem>>, vector<128x128xf32>,
    } else {
    }
    %c0 = arith.constant 0 : index
    %c0_1 = arith.constant 0 : index
    %3 = vector.load %arg7[%c0, %c0_1] : memref<128x128xf32, #tpu.memory_space<vmem>>, vector<128x128xf32>
    %c0_2 = arith.constant 0 : index
    %c0_3 = arith.constant 0 : index
    %4 = vector.load %arg2[%c0_2, %c0_3] : memref<128x128xbf16, #tpu.memory_space<vmem>>, vector<128x128xbf16>
    %c0_4 = arith.constant 0 : index
    %c0_5 = arith.constant 0 : index
    %5 = vector.load %arg3[%c0_4, %c0_5] : memref<128x128xbf16, #tpu.memory_space<vmem>>, vector<128x128xbf16>
    %cst = arith.constant dense<0.000000e+00> : vector<128x128xf32>
    %6 = tpu.matmul %4, %5, %cst {dimension_numbers = #tpu.dot_dimension_numbers<[1], [0], [0], [1], [0, 0, 1, 1], [], []>} : vector<128x128xbf16>, vector<128x128xbf16>, vector<128x128xf32> -> vector<128x128xf32>
    %7 = arith.addf %3, %6 : vector<128x128xf32>
    %c0_6 = arith.constant 0 : index
    %c0_7 = arith.constant 0 : index
    %8 = vector.load %arg7[%c0_6, %c0_7] : memref<128x128xf32, #tpu.memory_space<vmem>>, vector<128x128xf32>
    tpu.vector_store %arg7[%c0_6, %c0_7], %7 {strides = array<i32>} : memref<128x128xf32, #tpu.memory_space<vmem>>, vector<128x128xf32>,
    %c0_i32_8 = arith.constant 0 : i32
    %9 = arith.cmpi eq, %arg1, %c0_i32_8 : i32
    %10 = arith.extui %9 : i1 to i32
    %c0_i32_9 = arith.constant 0 : i32
    %11 = arith.cmpi ne, %10, %c0_i32_9 : i32
    scf.if %11 {
      %c0_10 = arith.constant 0 : index
      %c0_11 = arith.constant 0 : index
      %12 = vector.load %arg7[%c0_10, %c0_11] : memref<128x128xf32, #tpu.memory_space<vmem>>, vector<128x128xf32>
      %c0_12 = arith.constant 0 : index
      %c0_13 = arith.constant 0 : index
      %13 = vector.load %arg4[%c0_12, %c0_13] : memref<1x128xf32, #tpu.memory_space<vmem>>, vector<1x128xf32>
      %14 = vector.broadcast %13 : vector<1x128xf32> to vector<128x128xf32>
      %15 = arith.mulf %12, %14 : vector<128x128xf32>
      %c0_14 = arith.constant 0 : index
      %c0_15 = arith.constant 0 : index
      %16 = vector.load %arg5[%c0_14, %c0_15] : memref<1x128xf32, #tpu.memory_space<vmem>>, vector<1x128xf32>
      %17 = vector.broadcast %16 : vector<1x128xf32> to vector<128x128xf32>
      %18 = arith.addf %15, %17 : vector<128x128xf32>
      %cst_16 = arith.constant 0.000000e+00 : f32
      %19 = vector.broadcast %cst_16 : f32 to vector<128x128xf32>
      %20 = arith.maximumf %18, %19 : vector<128x128xf32>
      %21 = arith.truncf %20 : vector<128x128xf32> to vector<128x128xbf16>
      %c0_17 = arith.constant 0 : index
      %c0_18 = arith.constant 0 : index
      %22 = vector.load %arg6[%c0_17, %c0_18] : memref<128x128xbf16, #tpu.memory_space<vmem>>, vector<128x128xbf16>
      tpu.vector_store %arg6[%c0_17, %c0_18], %21 {strides = array<i32>} : memref<128x128xbf16, #tpu.memory_space<vmem>>, vector<128x128xbf16>,
    } else {
    }
    return
  }
  func.func @transform_0(%arg0: i32, %arg1: i32) -> (i32, i32) {
    %c0_i32 = arith.constant 0 : i32
    return %arg0, %arg1 : i32, i32
  }
  func.func @transform_1(%arg0: i32, %arg1: i32) -> (i32, i32) {
    %c0_i32 = arith.constant 0 : i32
    %c0_i32_0 = arith.constant 0 : i32
    return %arg1, %c0_i32 : i32, i32
  }
  func.func @transform_2(%arg0: i32, %arg1: i32) -> (i32, i32) {
    %c0_i32 = arith.constant 0 : i32
    %c0_i32_0 = arith.constant 0 : i32
    %c0_i32_1 = arith.constant 0 : i32
    return %c0_i32, %c0_i32_0 : i32, i32
  }
  func.func @transform_3(%arg0: i32, %arg1: i32) -> (i32, i32) {
    %c0_i32 = arith.constant 0 : i32
    %c0_i32_0 = arith.constant 0 : i32
    %c0_i32_1 = arith.constant 0 : i32
    return %c0_i32, %c0_i32_0 : i32, i32
  }
  func.func @transform_4(%arg0: i32, %arg1: i32) -> (i32, i32) {
    %c0_i32 = arith.constant 0 : i32
    %c0_i32_0 = arith.constant 0 : i32
    return %arg0, %c0_i32 : i32, i32
  }
}

module attributes {stable_mosaic.version = 11 : i64} {
  func.func @_fused_matmul_kernel(%arg0: i32, %arg1: i32, %arg2: memref<128x128xbf16, #tpu.memory_space<vmem>>, %arg3: memref<128x128xbf16, #tpu.memory_space<vmem>>, %arg4: memref<1x128xf32, #tpu.memory_space<vmem>>, %arg5: memref<1x128xf32, #tpu.memory_space<vmem>>, %arg6: memref<128x128xf32, #tpu.memory_space<vmem>>, %arg7: memref<128x128xf32, #tpu.memory_space<vmem>>) attributes {dimension_semantics = [#tpu.dimension_semantics<parallel>, #tpu.dimension_semantics<arbitrary>], iteration_bounds = array<i64: 1, 1>, scalar_prefetch = 0 : i64, scratch_operands = 1 : i64, tpu.core_type = #tpu.core_type<tc>, window_params = [{transform_indices = @transform_0, window_bounds = array<i64: 128, 128>}, {transform_indices = @transform_1, window_bounds = array<i64: 128, 128>}, {pipeline_mode = #tpu.pipeline_mode<synchronous>, transform_indices = @transform_2, window_bounds = array<i64: 1, 128>}, {pipeline_mode = #tpu.pipeline_mode<synchronous>, transform_indices = @transform_3, window_bounds = array<i64: 1, 128>}, {transform_indices = @transform_4, window_bounds = array<i64: 128, 128>}]} {
    %c0_i32 = arith.constant 0 : i32
    %0 = arith.cmpi eq, %arg1, %c0_i32 : i32
    %1 = arith.extui %0 : i1 to i32
    %c0_i32_0 = arith.constant 0 : i32
    %2 = arith.cmpi ne, %1, %c0_i32_0 : i32
    scf.if %2 {
      %cst_10 = arith.constant 0.000000e+00 : f32
      %12 = vector.broadcast %cst_10 : f32 to vector<128x128xf32>
      %c0_11 = arith.constant 0 : index
      %c0_12 = arith.constant 0 : index
      %13 = vector.load %arg7[%c0_11, %c0_12] : memref<128x128xf32, #tpu.memory_space<vmem>>, vector<128x128xf32>
      tpu.vector_store %arg7[%c0_11, %c0_12], %12 {strides = array<i32>} : memref<128x128xf32, #tpu.memory_space<vmem>>, vector<128x128xf32>,
    } else {
    }
    %c0 = arith.constant 0 : index
    %c0_1 = arith.constant 0 : index
    %3 = vector.load %arg7[%c0, %c0_1] : memref<128x128xf32, #tpu.memory_space<vmem>>, vector<128x128xf32>
    %c0_2 = arith.constant 0 : index
    %c0_3 = arith.constant 0 : index
    %4 = vector.load %arg2[%c0_2, %c0_3] : memref<128x128xbf16, #tpu.memory_space<vmem>>, vector<128x128xbf16>
    %c0_4 = arith.constant 0 : index
    %c0_5 = arith.constant 0 : index
    %5 = vector.load %arg3[%c0_4, %c0_5] : memref<128x128xbf16, #tpu.memory_space<vmem>>, vector<128x128xbf16>
    %cst = arith.constant dense<0.000000e+00> : vector<128x128xf32>
    %6 = tpu.matmul %4, %5, %cst {dimension_numbers = #tpu.dot_dimension_numbers<[1], [0], [0], [1], [0, 0, 1, 1], [], []>} : vector<128x128xbf16>, vector<128x128xbf16>, vector<128x128xf32> -> vector<128x128xf32>
    %7 = arith.addf %3, %6 : vector<128x128xf32>
    %c0_6 = arith.constant 0 : index
    %c0_7 = arith.constant 0 : index
    %8 = vector.load %arg7[%c0_6, %c0_7] : memref<128x128xf32, #tpu.memory_space<vmem>>, vector<128x128xf32>
    tpu.vector_store %arg7[%c0_6, %c0_7], %7 {strides = array<i32>} : memref<128x128xf32, #tpu.memory_space<vmem>>, vector<128x128xf32>,
    %c0_i32_8 = arith.constant 0 : i32
    %9 = arith.cmpi eq, %arg1, %c0_i32_8 : i32
    %10 = arith.extui %9 : i1 to i32
    %c0_i32_9 = arith.constant 0 : i32
    %11 = arith.cmpi ne, %10, %c0_i32_9 : i32
    scf.if %11 {
      %c0_10 = arith.constant 0 : index
      %c0_11 = arith.constant 0 : index
      %12 = vector.load %arg7[%c0_10, %c0_11] : memref<128x128xf32, #tpu.memory_space<vmem>>, vector<128x128xf32>
      %c0_12 = arith.constant 0 : index
      %c0_13 = arith.constant 0 : index
      %13 = vector.load %arg4[%c0_12, %c0_13] : memref<1x128xf32, #tpu.memory_space<vmem>>, vector<1x128xf32>
      %14 = vector.broadcast %13 : vector<1x128xf32> to vector<128x128xf32>
      %15 = arith.mulf %12, %14 : vector<128x128xf32>
      %c0_14 = arith.constant 0 : index
      %c0_15 = arith.constant 0 : index
      %16 = vector.load %arg5[%c0_14, %c0_15] : memref<1x128xf32, #tpu.memory_space<vmem>>, vector<1x128xf32>
      %17 = vector.broadcast %16 : vector<1x128xf32> to vector<128x128xf32>
      %18 = arith.addf %15, %17 : vector<128x128xf32>
      %c0_16 = arith.constant 0 : index
      %c0_17 = arith.constant 0 : index
      %19 = vector.load %arg6[%c0_16, %c0_17] : memref<128x128xf32, #tpu.memory_space<vmem>>, vector<128x128xf32>
      tpu.vector_store %arg6[%c0_16, %c0_17], %18 {strides = array<i32>} : memref<128x128xf32, #tpu.memory_space<vmem>>, vector<128x128xf32>,
    } else {
    }
    return
  }
  func.func @transform_0(%arg0: i32, %arg1: i32) -> (i32, i32) {
    %c0_i32 = arith.constant 0 : i32
    return %arg0, %arg1 : i32, i32
  }
  func.func @transform_1(%arg0: i32, %arg1: i32) -> (i32, i32) {
    %c0_i32 = arith.constant 0 : i32
    %c0_i32_0 = arith.constant 0 : i32
    return %arg1, %c0_i32 : i32, i32
  }
  func.func @transform_2(%arg0: i32, %arg1: i32) -> (i32, i32) {
    %c0_i32 = arith.constant 0 : i32
    %c0_i32_0 = arith.constant 0 : i32
    %c0_i32_1 = arith.constant 0 : i32
    return %c0_i32, %c0_i32_0 : i32, i32
  }
  func.func @transform_3(%arg0: i32, %arg1: i32) -> (i32, i32) {
    %c0_i32 = arith.constant 0 : i32
    %c0_i32_0 = arith.constant 0 : i32
    %c0_i32_1 = arith.constant 0 : i32
    return %c0_i32, %c0_i32_0 : i32, i32
  }
  func.func @transform_4(%arg0: i32, %arg1: i32) -> (i32, i32) {
    %c0_i32 = arith.constant 0 : i32
    %c0_i32_0 = arith.constant 0 : i32
    return %arg0, %c0_i32 : i32, i32
  }
}

module attributes {stable_mosaic.version = 11 : i64} {
  func.func @_fused_matmul_kernel(%arg0: i32, %arg1: i32, %arg2: memref<128x128xbf16, #tpu.memory_space<vmem>>, %arg3: memref<128x128xbf16, #tpu.memory_space<vmem>>, %arg4: memref<1x128xf32, #tpu.memory_space<vmem>>, %arg5: memref<1x128xf32, #tpu.memory_space<vmem>>, %arg6: memref<128x128xf32, #tpu.memory_space<vmem>>, %arg7: memref<128x128xf32, #tpu.memory_space<vmem>>, %arg8: memref<128x128xf32, #tpu.memory_space<vmem>>) attributes {dimension_semantics = [#tpu.dimension_semantics<parallel>, #tpu.dimension_semantics<arbitrary>], iteration_bounds = array<i64: 1, 1>, scalar_prefetch = 0 : i64, scratch_operands = 1 : i64, tpu.core_type = #tpu.core_type<tc>, window_params = [{transform_indices = @transform_0, window_bounds = array<i64: 128, 128>}, {transform_indices = @transform_1, window_bounds = array<i64: 128, 128>}, {pipeline_mode = #tpu.pipeline_mode<synchronous>, transform_indices = @transform_2, window_bounds = array<i64: 1, 128>}, {pipeline_mode = #tpu.pipeline_mode<synchronous>, transform_indices = @transform_3, window_bounds = array<i64: 1, 128>}, {transform_indices = @transform_4, window_bounds = array<i64: 128, 128>}, {transform_indices = @transform_5, window_bounds = array<i64: 128, 128>}]} {
    %c0_i32 = arith.constant 0 : i32
    %0 = arith.cmpi eq, %arg1, %c0_i32 : i32
    %1 = arith.extui %0 : i1 to i32
    %c0_i32_0 = arith.constant 0 : i32
    %2 = arith.cmpi ne, %1, %c0_i32_0 : i32
    scf.if %2 {
      %cst_10 = arith.constant 0.000000e+00 : f32
      %12 = vector.broadcast %cst_10 : f32 to vector<128x128xf32>
      %c0_11 = arith.constant 0 : index
      %c0_12 = arith.constant 0 : index
      %13 = vector.load %arg8[%c0_11, %c0_12] : memref<128x128xf32, #tpu.memory_space<vmem>>, vector<128x128xf32>
      tpu.vector_store %arg8[%c0_11, %c0_12], %12 {strides = array<i32>} : memref<128x128xf32, #tpu.memory_space<vmem>>, vector<128x128xf32>,
    } else {
    }
    %c0 = arith.constant 0 : index
    %c0_1 = arith.constant 0 : index
    %3 = vector.load %arg8[%c0, %c0_1] : memref<128x128xf32, #tpu.memory_space<vmem>>, vector<128x128xf32>
    %c0_2 = arith.constant 0 : index
    %c0_3 = arith.constant 0 : index
    %4 = vector.load %arg2[%c0_2, %c0_3] : memref<128x128xbf16, #tpu.memory_space<vmem>>, vector<128x128xbf16>
    %c0_4 = arith.constant 0 : index
    %c0_5 = arith.constant 0 : index
    %5 = vector.load %arg3[%c0_4, %c0_5] : memref<128x128xbf16, #tpu.memory_space<vmem>>, vector<128x128xbf16>
    %cst = arith.constant dense<0.000000e+00> : vector<128x128xf32>
    %6 = tpu.matmul %4, %5, %cst {dimension_numbers = #tpu.dot_dimension_numbers<[1], [0], [0], [1], [0, 0, 1, 1], [], []>} : vector<128x128xbf16>, vector<128x128xbf16>, vector<128x128xf32> -> vector<128x128xf32>
    %7 = arith.addf %3, %6 : vector<128x128xf32>
    %c0_6 = arith.constant 0 : index
    %c0_7 = arith.constant 0 : index
    %8 = vector.load %arg8[%c0_6, %c0_7] : memref<128x128xf32, #tpu.memory_space<vmem>>, vector<128x128xf32>
    tpu.vector_store %arg8[%c0_6, %c0_7], %7 {strides = array<i32>} : memref<128x128xf32, #tpu.memory_space<vmem>>, vector<128x128xf32>,
    %c0_i32_8 = arith.constant 0 : i32
    %9 = arith.cmpi eq, %arg1, %c0_i32_8 : i32
    %10 = arith.extui %9 : i1 to i32
    %c0_i32_9 = arith.constant 0 : i32
    %11 = arith.cmpi ne, %10, %c0_i32_9 : i32
    scf.if %11 {
      %c0_10 = arith.constant 0 : index
      %c0_11 = arith.constant 0 : index
      %12 = vector.load %arg8[%c0_10, %c0_11] : memref<128x128xf32, #tpu.memory_space<vmem>>, vector<128x128xf32>
      %c0_12 = arith.constant 0 : index
      %c0_13 = arith.constant 0 : index
      %13 = vector.load %arg4[%c0_12, %c0_13] : memref<1x128xf32, #tpu.memory_space<vmem>>, vector<1x128xf32>
      %14 = vector.broadcast %13 : vector<1x128xf32> to vector<128x128xf32>
      %15 = arith.mulf %12, %14 : vector<128x128xf32>
      %c0_14 = arith.constant 0 : index
      %c0_15 = arith.constant 0 : index
      %16 = vector.load %arg5[%c0_14, %c0_15] : memref<1x128xf32, #tpu.memory_space<vmem>>, vector<1x128xf32>
      %17 = vector.broadcast %16 : vector<1x128xf32> to vector<128x128xf32>
      %18 = arith.addf %15, %17 : vector<128x128xf32>
      %c0_16 = arith.constant 0 : index
      %c0_17 = arith.constant 0 : index
      %19 = vector.load %arg6[%c0_16, %c0_17] : memref<128x128xf32, #tpu.memory_space<vmem>>, vector<128x128xf32>
      %20 = arith.addf %18, %19 : vector<128x128xf32>
      %cst_18 = arith.constant 0.000000e+00 : f32
      %21 = vector.broadcast %cst_18 : f32 to vector<128x128xf32>
      %22 = arith.maximumf %20, %21 : vector<128x128xf32>
      %c0_19 = arith.constant 0 : index
      %c0_20 = arith.constant 0 : index
      %23 = vector.load %arg7[%c0_19, %c0_20] : memref<128x128xf32, #tpu.memory_space<vmem>>, vector<128x128xf32>
      tpu.vector_store %arg7[%c0_19, %c0_20], %22 {strides = array<i32>} : memref<128x128xf32, #tpu.memory_space<vmem>>, vector<128x128xf32>,
    } else {
    }
    return
  }
  func.func @transform_0(%arg0: i32, %arg1: i32) -> (i32, i32) {
    %c0_i32 = arith.constant 0 : i32
    return %arg0, %arg1 : i32, i32
  }
  func.func @transform_1(%arg0: i32, %arg1: i32) -> (i32, i32) {
    %c0_i32 = arith.constant 0 : i32
    %c0_i32_0 = arith.constant 0 : i32
    return %arg1, %c0_i32 : i32, i32
  }
  func.func @transform_2(%arg0: i32, %arg1: i32) -> (i32, i32) {
    %c0_i32 = arith.constant 0 : i32
    %c0_i32_0 = arith.constant 0 : i32
    %c0_i32_1 = arith.constant 0 : i32
    return %c0_i32, %c0_i32_0 : i32, i32
  }
  func.func @transform_3(%arg0: i32, %arg1: i32) -> (i32, i32) {
    %c0_i32 = arith.constant 0 : i32
    %c0_i32_0 = arith.constant 0 : i32
    %c0_i32_1 = arith.constant 0 : i32
    return %c0_i32, %c0_i32_0 : i32, i32
  }
  func.func @transform_4(%arg0: i32, %arg1: i32) -> (i32, i32) {
    %c0_i32 = arith.constant 0 : i32
    %c0_i32_0 = arith.constant 0 : i32
    return %arg0, %c0_i32 : i32, i32
  }
  func.func @transform_5(%arg0: i32, %arg1: i32) -> (i32, i32) {
    %c0_i32 = arith.constant 0 : i32
    %c0_i32_0 = arith.constant 0 : i32
    return %arg0, %c0_i32 : i32, i32
  }
}

</mosaic_0001>

<llo_original>
// kernel: basic_block_forward.3
$region0: #{basic_block_forward.3}
  #allocation0 [shape = 'u32[]', space=smem, size = 0x4, offset = 0x4, fixed_abs, tag = 'smem constant byte address 0x4 - core index']
  #allocation1 [shape = 'u32[144,128]{1,0:T(1,128)}', space=vmem, size = 0x12000, scoped, tag = 'internal scratch']
  #allocation2 [shape = 'f32[128,128]{1,0:T(8,128)}', space=vmem, size = 0x10000, scoped, tag = 'scratch operand']
  %s0 = inlined_call_operand.vmem [shape: bf16[128,128], index: 0, kind: input, shape index: {}]
  %s1 = inlined_call_operand.vmem [shape: bf16[128,128], index: 1, kind: input, shape index: {}]
  %s2 = inlined_call_operand.vmem [shape: f32[1,128], index: 2, kind: input, shape index: {}]
  %s3 = inlined_call_operand.vmem [shape: f32[1,128], index: 3, kind: input, shape index: {}]
  %s4 = inlined_call_operand.vmem [shape: bf16[128,128], index: 4, kind: output, shape index: {}]
  %s5 = sld [smem:[#allocation0]]
  $region34: #{basic_block_forward.3} parent=0
    _
  %s7 = ssub.s32 1, %s5
  %s8 = scalar_select 0, %s7, %s5
  // Predicated region
  $region2: #{basic_block_forward.3} parent=0 // pred_check
    _
  $region3: #{basic_block_forward.3} parent=0 // pred_check_branch
    %10 = sbr.rel (0) target = $region5
  $region4: #{basic_block_forward.3} parent=0 // pred_region
    _
  $region5: #{basic_block_forward.3} parent=0 // pred_fallthru
    _
  // Predicated region
  $region6: #{basic_block_forward.3} parent=0 // pred_check
    _
  $region7: #{basic_block_forward.3} parent=0 // pred_check_branch
    %12 = sbr.rel (0) target = $region9
  $region8: #{basic_block_forward.3} parent=0 // pred_region
    _
  $region9: #{basic_block_forward.3} parent=0 // pred_fallthru
    _
  // Predicated region
  $region10: #{basic_block_forward.3} parent=0 // pred_check
    _
  $region11: #{basic_block_forward.3} parent=0 // pred_check_branch
    %14 = sbr.rel (0) target = $region13
  $region12: #{basic_block_forward.3} parent=0 // pred_region
    _
  $region13: #{basic_block_forward.3} parent=0 // pred_fallthru
    _
  // Predicated region
  $region14: #{basic_block_forward.3} parent=0 // pred_check
    _
  $region15: #{basic_block_forward.3} parent=0 // pred_check_branch
    %16 = sbr.rel (0) target = $region17
  $region16: #{basic_block_forward.3} parent=0 // pred_region
    _
  $region17: #{basic_block_forward.3} parent=0 // pred_fallthru
    _
  %p18 = scmp.eq.s32.totalorder 0, 0
  // Predicated region
  $region18: #{basic_block_forward.3} parent=0 // pred_check
    %p19 = pneg %p18
  $region19: #{basic_block_forward.3} parent=0 // pred_check_branch
    %21 = sbr.rel (%p19) target = $region21
  $region20: #{basic_block_forward.3} parent=0 // pred_region
    %22 = vst [vmem:[#allocation2] sm:$0xff] 0.0
    %23 = vst [vmem:[#allocation2 + $0x8] sm:$0xff] 0.0
    %24 = vst [vmem:[#allocation2 + $0x10] sm:$0xff] 0.0
    %25 = vst [vmem:[#allocation2 + $0x18] sm:$0xff] 0.0
    %26 = vst [vmem:[#allocation2 + $0x20] sm:$0xff] 0.0
    %27 = vst [vmem:[#allocation2 + $0x28] sm:$0xff] 0.0
    %28 = vst [vmem:[#allocation2 + $0x30] sm:$0xff] 0.0
    %29 = vst [vmem:[#allocation2 + $0x38] sm:$0xff] 0.0
    %30 = vst [vmem:[#allocation2 + $0x40] sm:$0xff] 0.0
    %31 = vst [vmem:[#allocation2 + $0x48] sm:$0xff] 0.0
    %32 = vst [vmem:[#allocation2 + $0x50] sm:$0xff] 0.0
    %33 = vst [vmem:[#allocation2 + $0x58] sm:$0xff] 0.0
    %34 = vst [vmem:[#allocation2 + $0x60] sm:$0xff] 0.0
    %35 = vst [vmem:[#allocation2 + $0x68] sm:$0xff] 0.0
    %36 = vst [vmem:[#allocation2 + $0x70] sm:$0xff] 0.0
    %37 = vst [vmem:[#allocation2 + $0x78] sm:$0xff] 0.0
  $region21: #{basic_block_forward.3} parent=0 // pred_fallthru
    _
  %v38 = vld [vmem:[#allocation2] sm:$0xff]
  %v39 = vld [vmem:[#allocation2 + $0x8] sm:$0xff]
  %v40 = vld [vmem:[#allocation2 + $0x10] sm:$0xff]
  %v41 = vld [vmem:[#allocation2 + $0x18] sm:$0xff]
  %v42 = vld [vmem:[#allocation2 + $0x20] sm:$0xff]
  %v43 = vld [vmem:[#allocation2 + $0x28] sm:$0xff]
  %v44 = vld [vmem:[#allocation2 + $0x30] sm:$0xff]
  %v45 = vld [vmem:[#allocation2 + $0x38] sm:$0xff]
  %v46 = vld [vmem:[#allocation2 + $0x40] sm:$0xff]
  %v47 = vld [vmem:[#allocation2 + $0x48] sm:$0xff]
  %v48 = vld [vmem:[#allocation2 + $0x50] sm:$0xff]
  %v49 = vld [vmem:[#allocation2 + $0x58] sm:$0xff]
  %v50 = vld [vmem:[#allocation2 + $0x60] sm:$0xff]
  %v51 = vld [vmem:[#allocation2 + $0x68] sm:$0xff]
  %v52 = vld [vmem:[#allocation2 + $0x70] sm:$0xff]
  %v53 = vld [vmem:[#allocation2 + $0x78] sm:$0xff]
  %v54 = vld [vmem:[%s0] sm:$0xf]
  %v55 = vld [vmem:[%s0 + $0x4] sm:$0xf]
  %v56 = vld [vmem:[%s0 + $0x8] sm:$0xf]
  %v57 = vld [vmem:[%s0 + $0xc] sm:$0xf]
  %v58 = vld [vmem:[%s0 + $0x10] sm:$0xf]
  %v59 = vld [vmem:[%s0 + $0x14] sm:$0xf]
  %v60 = vld [vmem:[%s0 + $0x18] sm:$0xf]
  %v61 = vld [vmem:[%s0 + $0x1c] sm:$0xf]
  %v62 = vld [vmem:[%s0 + $0x20] sm:$0xf]
  %v63 = vld [vmem:[%s0 + $0x24] sm:$0xf]
  %v64 = vld [vmem:[%s0 + $0x28] sm:$0xf]
  %v65 = vld [vmem:[%s0 + $0x2c] sm:$0xf]
  %v66 = vld [vmem:[%s0 + $0x30] sm:$0xf]
  %v67 = vld [vmem:[%s0 + $0x34] sm:$0xf]
  %v68 = vld [vmem:[%s0 + $0x38] sm:$0xf]
  %v69 = vld [vmem:[%s0 + $0x3c] sm:$0xf]
  %v70 = vld [vmem:[%s1] sm:$0xf]
  %v71 = vld [vmem:[%s1 + $0x4] sm:$0xf]
  %v72 = vld [vmem:[%s1 + $0x8] sm:$0xf]
  %v73 = vld [vmem:[%s1 + $0xc] sm:$0xf]
  %v74 = vld [vmem:[%s1 + $0x10] sm:$0xf]
  %v75 = vld [vmem:[%s1 + $0x14] sm:$0xf]
  %v76 = vld [vmem:[%s1 + $0x18] sm:$0xf]
  %v77 = vld [vmem:[%s1 + $0x1c] sm:$0xf]
  %v78 = vld [vmem:[%s1 + $0x20] sm:$0xf]
  %v79 = vld [vmem:[%s1 + $0x24] sm:$0xf]
  %v80 = vld [vmem:[%s1 + $0x28] sm:$0xf]
  %v81 = vld [vmem:[%s1 + $0x2c] sm:$0xf]
  %v82 = vld [vmem:[%s1 + $0x30] sm:$0xf]
  %v83 = vld [vmem:[%s1 + $0x34] sm:$0xf]
  %v84 = vld [vmem:[%s1 + $0x38] sm:$0xf]
  %v85 = vld [vmem:[%s1 + $0x3c] sm:$0xf]
  %v102 = vunpack.c.l.b16 %v54
  %v103 = vunpack.c.l.b16 %v55
  %v104 = vunpack.c.l.b16 %v56
  %v105 = vunpack.c.l.b16 %v57
  %v106 = vunpack.c.l.b16 %v58
  %v107 = vunpack.c.l.b16 %v59
  %v108 = vunpack.c.l.b16 %v60
  %v109 = vunpack.c.l.b16 %v61
  %v110 = vunpack.c.l.b16 %v62
  %v111 = vunpack.c.l.b16 %v63
  %v112 = vunpack.c.l.b16 %v64
  %v113 = vunpack.c.l.b16 %v65
  %v114 = vunpack.c.l.b16 %v66
  %v115 = vunpack.c.l.b16 %v67
  %v116 = vunpack.c.l.b16 %v68
  %v117 = vunpack.c.l.b16 %v69
  %v118 = vpack.c.b16 %v103, %v102
  %v119 = vpack.c.b16 %v105, %v104
  %v120 = vpack.c.b16 %v107, %v106
  %v121 = vpack.c.b16 %v109, %v108
  %v122 = vpack.c.b16 %v111, %v110
  %v123 = vpack.c.b16 %v113, %v112
  %v124 = vpack.c.b16 %v115, %v114
  %v125 = vpack.c.b16 %v117, %v116
  %v150 = vunpack.c.l.b16 %v70
  %v151 = vunpack.c.l.b16 %v71
  %v152 = vunpack.c.l.b16 %v72
  %v153 = vunpack.c.l.b16 %v73
  %v154 = vunpack.c.l.b16 %v74
  %v155 = vunpack.c.l.b16 %v75
  %v156 = vunpack.c.l.b16 %v76
  %v157 = vunpack.c.l.b16 %v77
  %v158 = vunpack.c.l.b16 %v78
  %v159 = vunpack.c.l.b16 %v79
  %v160 = vunpack.c.l.b16 %v80
  %v161 = vunpack.c.l.b16 %v81
  %v162 = vunpack.c.l.b16 %v82
  %v163 = vunpack.c.l.b16 %v83
  %v164 = vunpack.c.l.b16 %v84
  %v165 = vunpack.c.l.b16 %v85
  %v166 = vpack.c.b16 %v151, %v150
  %v167 = vpack.c.b16 %v153, %v152
  %v168 = vpack.c.b16 %v155, %v154
  %v169 = vpack.c.b16 %v157, %v156
  %v170 = vpack.c.b16 %v159, %v158
  %v171 = vpack.c.b16 %v161, %v160
  %v172 = vpack.c.b16 %v163, %v162
  %v173 = vpack.c.b16 %v165, %v164
  %182 = vmatprep.subr.bf16.mxu0 0
  %183 = vmatpush1.bf16.msra.mxu0 %v173
  %184 = vmatprep.subr.bf16.mxu0 0
  %185 = vmatpush1.bf16.msra.mxu0 %v172
  %186 = vmatprep.subr.bf16.mxu0 0
  %187 = vmatpush1.bf16.msra.mxu0 %v171
  %188 = vmatprep.subr.bf16.mxu0 0
  %189 = vmatpush1.bf16.msra.mxu0 %v170
  %190 = vmatprep.subr.bf16.mxu0 0
  %191 = vmatpush1.bf16.msra.mxu0 %v169
  %192 = vmatprep.subr.bf16.mxu0 0
  %193 = vmatpush1.bf16.msra.mxu0 %v168
  %194 = vmatprep.subr.bf16.mxu0 0
  %195 = vmatpush1.bf16.msra.mxu0 %v167
  %196 = vmatprep.subr.bf16.mxu0 0
  %197 = vmatpush1.bf16.msra.mxu0 %v166
  %198 = vmatprep.subr.bf16.mxu0 0
  %199 = vmatpush2.bf16.msra.mxu0 0
  %200 = vmatprep.subr.bf16.mxu0 0
  %201 = vmatpush2.bf16.msra.mxu0 0
  %202 = vmatprep.subr.bf16.mxu0 0
  %203 = vmatpush2.bf16.msra.mxu0 0
  %204 = vmatprep.subr.bf16.mxu0 0
  %205 = vmatpush2.bf16.msra.mxu0 0
  %206 = vmatprep.subr.bf16.mxu0 0
  %207 = vmatpush2.bf16.msra.mxu0 0
  %208 = vmatprep.subr.bf16.mxu0 0
  %209 = vmatpush2.bf16.msra.mxu0 0
  %210 = vmatprep.subr.bf16.mxu0 0
  %211 = vmatpush2.bf16.msra.mxu0 0
  %212 = vmatprep.subr.bf16.mxu0 0
  %213 = vmatpush2.bf16.msra.mxu0 0
  %214 = vmatprep.mubr.bf16.mxu0 0
  %215 = vmatmul.mubr.bf16.gmra.mxu0 %v118
  %v216 = vpop.f32.mrf.mxu0
  %v217 = vadd.f32 0.0, %v216
  %v218 = vpop.f32.mrf.mxu0
  %v219 = vpop.f32.mrf.mxu0
  %v220 = vadd.f32 0.0, %v219
  %v221 = vpop.f32.mrf.mxu0
  %222 = vmatprep.mubr.bf16.mxu0 0
  %223 = vmatmul.mubr.bf16.gmra.mxu0 %v119
  %v224 = vpop.f32.mrf.mxu0
  %v225 = vadd.f32 0.0, %v224
  %v226 = vpop.f32.mrf.mxu0
  %v227 = vpop.f32.mrf.mxu0
  %v228 = vadd.f32 0.0, %v227
  %v229 = vpop.f32.mrf.mxu0
  %230 = vmatprep.mubr.bf16.mxu0 0
  %231 = vmatmul.mubr.bf16.gmra.mxu0 %v120
  %v232 = vpop.f32.mrf.mxu0
  %v233 = vadd.f32 0.0, %v232
  %v234 = vpop.f32.mrf.mxu0
  %v235 = vpop.f32.mrf.mxu0
  %v236 = vadd.f32 0.0, %v235
  %v237 = vpop.f32.mrf.mxu0
  %238 = vmatprep.mubr.bf16.mxu0 0
  %239 = vmatmul.mubr.bf16.gmra.mxu0 %v121
  %v240 = vpop.f32.mrf.mxu0
  %v241 = vadd.f32 0.0, %v240
  %v242 = vpop.f32.mrf.mxu0
  %v243 = vpop.f32.mrf.mxu0
  %v244 = vadd.f32 0.0, %v243
  %v245 = vpop.f32.mrf.mxu0
  %246 = vmatprep.mubr.bf16.mxu0 0
  %247 = vmatmul.mubr.bf16.gmra.mxu0 %v122
  %v248 = vpop.f32.mrf.mxu0
  %v249 = vadd.f32 0.0, %v248
  %v250 = vpop.f32.mrf.mxu0
  %v251 = vpop.f32.mrf.mxu0
  %v252 = vadd.f32 0.0, %v251
  %v253 = vpop.f32.mrf.mxu0
  %254 = vmatprep.mubr.bf16.mxu0 0
  %255 = vmatmul.mubr.bf16.gmra.mxu0 %v123
  %v256 = vpop.f32.mrf.mxu0
  %v257 = vadd.f32 0.0, %v256
  %v258 = vpop.f32.mrf.mxu0
  %v259 = vpop.f32.mrf.mxu0
  %v260 = vadd.f32 0.0, %v259
  %v261 = vpop.f32.mrf.mxu0
  %262 = vmatprep.mubr.bf16.mxu0 0
  %263 = vmatmul.mubr.bf16.gmra.mxu0 %v124
  %v264 = vpop.f32.mrf.mxu0
  %v265 = vadd.f32 0.0, %v264
  %v266 = vpop.f32.mrf.mxu0
  %v267 = vpop.f32.mrf.mxu0
  %v268 = vadd.f32 0.0, %v267
  %v269 = vpop.f32.mrf.mxu0
  %270 = vmatprep.mubr.bf16.mxu0 0
  %271 = vmatmul.mubr.bf16.gmra.mxu0 %v125
  %v272 = vpop.f32.mrf.mxu0
  %v273 = vadd.f32 0.0, %v272
  %v274 = vpop.f32.mrf.mxu0
  %v275 = vpop.f32.mrf.mxu0
  %v276 = vadd.f32 0.0, %v275
  %v277 = vpop.f32.mrf.mxu0
  %278 = vdwg.mxu0
  %v279 = vadd.f32 %v38, %v217
  %v280 = vadd.f32 %v39, %v220
  %v281 = vadd.f32 %v40, %v225
  %v282 = vadd.f32 %v41, %v228
  %v283 = vadd.f32 %v42, %v233
  %v284 = vadd.f32 %v43, %v236
  %v285 = vadd.f32 %v44, %v241
  %v286 = vadd.f32 %v45, %v244
  %v287 = vadd.f32 %v46, %v249
  %v288 = vadd.f32 %v47, %v252
  %v289 = vadd.f32 %v48, %v257
  %v290 = vadd.f32 %v49, %v260
  %v291 = vadd.f32 %v50, %v265
  %v292 = vadd.f32 %v51, %v268
  %v293 = vadd.f32 %v52, %v273
  %v294 = vadd.f32 %v53, %v276
  %295 = vst [vmem:[#allocation2] sm:$0xff] %v279
  %296 = vst [vmem:[#allocation2 + $0x8] sm:$0xff] %v280
  %297 = vst [vmem:[#allocation2 + $0x10] sm:$0xff] %v281
  %298 = vst [vmem:[#allocation2 + $0x18] sm:$0xff] %v282
  %299 = vst [vmem:[#allocation2 + $0x20] sm:$0xff] %v283
  %300 = vst [vmem:[#allocation2 + $0x28] sm:$0xff] %v284
  %301 = vst [vmem:[#allocation2 + $0x30] sm:$0xff] %v285
  %302 = vst [vmem:[#allocation2 + $0x38] sm:$0xff] %v286
  %303 = vst [vmem:[#allocation2 + $0x40] sm:$0xff] %v287
  %304 = vst [vmem:[#allocation2 + $0x48] sm:$0xff] %v288
  %305 = vst [vmem:[#allocation2 + $0x50] sm:$0xff] %v289
  %306 = vst [vmem:[#allocation2 + $0x58] sm:$0xff] %v290
  %307 = vst [vmem:[#allocation2 + $0x60] sm:$0xff] %v291
  %308 = vst [vmem:[#allocation2 + $0x68] sm:$0xff] %v292
  %309 = vst [vmem:[#allocation2 + $0x70] sm:$0xff] %v293
  %310 = vst [vmem:[#allocation2 + $0x78] sm:$0xff] %v294
  // Predicated region
  $region22: #{basic_block_forward.3} parent=0 // pred_check
    %p311 = pneg %p18
  $region23: #{basic_block_forward.3} parent=0 // pred_check_branch
    %313 = sbr.rel (%p311) target = $region25
  $region24: #{basic_block_forward.3} parent=0 // pred_region
    %v314 = vld [vmem:[#allocation2] sm:$0xff]
    %v315 = vld [vmem:[#allocation2 + $0x8] sm:$0xff]
    %v316 = vld [vmem:[#allocation2 + $0x10] sm:$0xff]
    %v317 = vld [vmem:[#allocation2 + $0x18] sm:$0xff]
    %v318 = vld [vmem:[#allocation2 + $0x20] sm:$0xff]
    %v319 = vld [vmem:[#allocation2 + $0x28] sm:$0xff]
    %v320 = vld [vmem:[#allocation2 + $0x30] sm:$0xff]
    %v321 = vld [vmem:[#allocation2 + $0x38] sm:$0xff]
    %v322 = vld [vmem:[#allocation2 + $0x40] sm:$0xff]
    %v323 = vld [vmem:[#allocation2 + $0x48] sm:$0xff]
    %v324 = vld [vmem:[#allocation2 + $0x50] sm:$0xff]
    %v325 = vld [vmem:[#allocation2 + $0x58] sm:$0xff]
    %v326 = vld [vmem:[#allocation2 + $0x60] sm:$0xff]
    %v327 = vld [vmem:[#allocation2 + $0x68] sm:$0xff]
    %v328 = vld [vmem:[#allocation2 + $0x70] sm:$0xff]
    %v329 = vld [vmem:[#allocation2 + $0x78] sm:$0xff]
    %v330 = vld [vmem:[%s2] sm:$0x1]
    %v332 = vlaneseq
    %v333 = vshrl.u32 %v332, 7
    %v334 = vsub.s32 0, %v333
    %v335 = vrot.slane %v330, %v334
    %v337 = vmul.f32 %v314, %v335
    %v338 = vmul.f32 %v315, %v335
    %v339 = vmul.f32 %v316, %v335
    %v340 = vmul.f32 %v317, %v335
    %v341 = vmul.f32 %v318, %v335
    %v342 = vmul.f32 %v319, %v335
    %v343 = vmul.f32 %v320, %v335
    %v344 = vmul.f32 %v321, %v335
    %v345 = vmul.f32 %v322, %v335
    %v346 = vmul.f32 %v323, %v335
    %v347 = vmul.f32 %v324, %v335
    %v348 = vmul.f32 %v325, %v335
    %v349 = vmul.f32 %v326, %v335
    %v350 = vmul.f32 %v327, %v335
    %v351 = vmul.f32 %v328, %v335
    %v352 = vmul.f32 %v329, %v335
    %v353 = vld [vmem:[%s3] sm:$0x1]
    %v355 = vlaneseq
    %v356 = vshrl.u32 %v355, 7
    %v357 = vsub.s32 0, %v356
    %v358 = vrot.slane %v353, %v357
    %v360 = vadd.f32 %v337, %v358
    %v361 = vadd.f32 %v338, %v358
    %v362 = vadd.f32 %v339, %v358
    %v363 = vadd.f32 %v340, %v358
    %v364 = vadd.f32 %v341, %v358
    %v365 = vadd.f32 %v342, %v358
    %v366 = vadd.f32 %v343, %v358
    %v367 = vadd.f32 %v344, %v358
    %v368 = vadd.f32 %v345, %v358
    %v369 = vadd.f32 %v346, %v358
    %v370 = vadd.f32 %v347, %v358
    %v371 = vadd.f32 %v348, %v358
    %v372 = vadd.f32 %v349, %v358
    %v373 = vadd.f32 %v350, %v358
    %v374 = vadd.f32 %v351, %v358
    %v375 = vadd.f32 %v352, %v358
    %v376 = vmax.f32 %v360, 0.0
    %v377 = vmax.f32 %v361, 0.0
    %v378 = vmax.f32 %v362, 0.0
    %v379 = vmax.f32 %v363, 0.0
    %v380 = vmax.f32 %v364, 0.0
    %v381 = vmax.f32 %v365, 0.0
    %v382 = vmax.f32 %v366, 0.0
    %v383 = vmax.f32 %v367, 0.0
    %v384 = vmax.f32 %v368, 0.0
    %v385 = vmax.f32 %v369, 0.0
    %v386 = vmax.f32 %v370, 0.0
    %v387 = vmax.f32 %v371, 0.0
    %v388 = vmax.f32 %v372, 0.0
    %v389 = vmax.f32 %v373, 0.0
    %v390 = vmax.f32 %v374, 0.0
    %v391 = vmax.f32 %v375, 0.0
    %v392 = vpack.c.bf16 %v377, %v376
    %v393 = vpack.c.bf16 %v379, %v378
    %v394 = vpack.c.bf16 %v381, %v380
    %v395 = vpack.c.bf16 %v383, %v382
    %v396 = vpack.c.bf16 %v385, %v384
    %v397 = vpack.c.bf16 %v387, %v386
    %v398 = vpack.c.bf16 %v389, %v388
    %v399 = vpack.c.bf16 %v391, %v390
    %v408 = vunpack.c.l.b16 %v392
    %v409 = vunpack.c.h.b16 %v392
    %v410 = vunpack.c.l.b16 %v393
    %v411 = vunpack.c.h.b16 %v393
    %v412 = vunpack.c.l.b16 %v394
    %v413 = vunpack.c.h.b16 %v394
    %v414 = vunpack.c.l.b16 %v395
    %v415 = vunpack.c.h.b16 %v395
    %v416 = vunpack.c.l.b16 %v396
    %v417 = vunpack.c.h.b16 %v396
    %v418 = vunpack.c.l.b16 %v397
    %v419 = vunpack.c.h.b16 %v397
    %v420 = vunpack.c.l.b16 %v398
    %v421 = vunpack.c.h.b16 %v398
    %v422 = vunpack.c.l.b16 %v399
    %v423 = vunpack.c.h.b16 %v399
    %v424 = vpack.c.b16 %v408, %v408
    %v425 = vpack.c.b16 %v409, %v409
    %v426 = vpack.c.b16 %v410, %v410
    %v427 = vpack.c.b16 %v411, %v411
    %v428 = vpack.c.b16 %v412, %v412
    %v429 = vpack.c.b16 %v413, %v413
    %v430 = vpack.c.b16 %v414, %v414
    %v431 = vpack.c.b16 %v415, %v415
    %v432 = vpack.c.b16 %v416, %v416
    %v433 = vpack.c.b16 %v417, %v417
    %v434 = vpack.c.b16 %v418, %v418
    %v435 = vpack.c.b16 %v419, %v419
    %v436 = vpack.c.b16 %v420, %v420
    %v437 = vpack.c.b16 %v421, %v421
    %v438 = vpack.c.b16 %v422, %v422
    %v439 = vpack.c.b16 %v423, %v423
    %456 = vst [vmem:[%s4] sm:$0xf] %v424
    %457 = vst [vmem:[%s4 + $0x4] sm:$0xf] %v425
    %458 = vst [vmem:[%s4 + $0x8] sm:$0xf] %v426
    %459 = vst [vmem:[%s4 + $0xc] sm:$0xf] %v427
    %460 = vst [vmem:[%s4 + $0x10] sm:$0xf] %v428
    %461 = vst [vmem:[%s4 + $0x14] sm:$0xf] %v429
    %462 = vst [vmem:[%s4 + $0x18] sm:$0xf] %v430
    %463 = vst [vmem:[%s4 + $0x1c] sm:$0xf] %v431
    %464 = vst [vmem:[%s4 + $0x20] sm:$0xf] %v432
    %465 = vst [vmem:[%s4 + $0x24] sm:$0xf] %v433
    %466 = vst [vmem:[%s4 + $0x28] sm:$0xf] %v434
    %467 = vst [vmem:[%s4 + $0x2c] sm:$0xf] %v435
    %468 = vst [vmem:[%s4 + $0x30] sm:$0xf] %v436
    %469 = vst [vmem:[%s4 + $0x34] sm:$0xf] %v437
    %470 = vst [vmem:[%s4 + $0x38] sm:$0xf] %v438
    %471 = vst [vmem:[%s4 + $0x3c] sm:$0xf] %v439
  $region25: #{basic_block_forward.3} parent=0 // pred_fallthru
    _
  // Predicated region
  $region26: #{basic_block_forward.3} parent=0 // pred_check
    _
  $region27: #{basic_block_forward.3} parent=0 // pred_check_branch
    %473 = sbr.rel (0) target = $region29
  $region28: #{basic_block_forward.3} parent=0 // pred_region
    _
  $region29: #{basic_block_forward.3} parent=0 // pred_fallthru
    _
  // Predicated region
  $region30: #{basic_block_forward.3} parent=0 // pred_check
    _
  $region31: #{basic_block_forward.3} parent=0 // pred_check_branch
    %475 = sbr.rel (0) target = $region33
  $region32: #{basic_block_forward.3} parent=0 // pred_region
    _
  $region33: #{basic_block_forward.3} parent=0 // pred_fallthru
    _

// kernel: basic_block_forward.4
$region0: #{basic_block_forward.4}
  #allocation0 [shape = 'u32[]', space=smem, size = 0x4, offset = 0x4, fixed_abs, tag = 'smem constant byte address 0x4 - core index']
  #allocation1 [shape = 'u32[144,128]{1,0:T(1,128)}', space=vmem, size = 0x12000, scoped, tag = 'internal scratch']
  #allocation2 [shape = 'f32[128,128]{1,0:T(8,128)}', space=vmem, size = 0x10000, scoped, tag = 'scratch operand']
  %s0 = inlined_call_operand.vmem [shape: bf16[128,128], index: 0, kind: input, shape index: {}]
  %s1 = inlined_call_operand.vmem [shape: bf16[128,128], index: 1, kind: input, shape index: {}]
  %s2 = inlined_call_operand.vmem [shape: f32[1,128], index: 2, kind: input, shape index: {}]
  %s3 = inlined_call_operand.vmem [shape: f32[1,128], index: 3, kind: input, shape index: {}]
  %s4 = inlined_call_operand.vmem [shape: f32[128,128], index: 4, kind: output, shape index: {}]
  %s5 = sld [smem:[#allocation0]]
  $region34: #{basic_block_forward.4} parent=0
    _
  %s7 = ssub.s32 1, %s5
  %s8 = scalar_select 0, %s7, %s5
  // Predicated region
  $region2: #{basic_block_forward.4} parent=0 // pred_check
    _
  $region3: #{basic_block_forward.4} parent=0 // pred_check_branch
    %10 = sbr.rel (0) target = $region5
  $region4: #{basic_block_forward.4} parent=0 // pred_region
    _
  $region5: #{basic_block_forward.4} parent=0 // pred_fallthru
    _
  // Predicated region
  $region6: #{basic_block_forward.4} parent=0 // pred_check
    _
  $region7: #{basic_block_forward.4} parent=0 // pred_check_branch
    %12 = sbr.rel (0) target = $region9
  $region8: #{basic_block_forward.4} parent=0 // pred_region
    _
  $region9: #{basic_block_forward.4} parent=0 // pred_fallthru
    _
  // Predicated region
  $region10: #{basic_block_forward.4} parent=0 // pred_check
    _
  $region11: #{basic_block_forward.4} parent=0 // pred_check_branch
    %14 = sbr.rel (0) target = $region13
  $region12: #{basic_block_forward.4} parent=0 // pred_region
    _
  $region13: #{basic_block_forward.4} parent=0 // pred_fallthru
    _
  // Predicated region
  $region14: #{basic_block_forward.4} parent=0 // pred_check
    _
  $region15: #{basic_block_forward.4} parent=0 // pred_check_branch
    %16 = sbr.rel (0) target = $region17
  $region16: #{basic_block_forward.4} parent=0 // pred_region
    _
  $region17: #{basic_block_forward.4} parent=0 // pred_fallthru
    _
  %p18 = scmp.eq.s32.totalorder 0, 0
  // Predicated region
  $region18: #{basic_block_forward.4} parent=0 // pred_check
    %p19 = pneg %p18
  $region19: #{basic_block_forward.4} parent=0 // pred_check_branch
    %21 = sbr.rel (%p19) target = $region21
  $region20: #{basic_block_forward.4} parent=0 // pred_region
    %22 = vst [vmem:[#allocation2] sm:$0xff] 0.0
    %23 = vst [vmem:[#allocation2 + $0x8] sm:$0xff] 0.0
    %24 = vst [vmem:[#allocation2 + $0x10] sm:$0xff] 0.0
    %25 = vst [vmem:[#allocation2 + $0x18] sm:$0xff] 0.0
    %26 = vst [vmem:[#allocation2 + $0x20] sm:$0xff] 0.0
    %27 = vst [vmem:[#allocation2 + $0x28] sm:$0xff] 0.0
    %28 = vst [vmem:[#allocation2 + $0x30] sm:$0xff] 0.0
    %29 = vst [vmem:[#allocation2 + $0x38] sm:$0xff] 0.0
    %30 = vst [vmem:[#allocation2 + $0x40] sm:$0xff] 0.0
    %31 = vst [vmem:[#allocation2 + $0x48] sm:$0xff] 0.0
    %32 = vst [vmem:[#allocation2 + $0x50] sm:$0xff] 0.0
    %33 = vst [vmem:[#allocation2 + $0x58] sm:$0xff] 0.0
    %34 = vst [vmem:[#allocation2 + $0x60] sm:$0xff] 0.0
    %35 = vst [vmem:[#allocation2 + $0x68] sm:$0xff] 0.0
    %36 = vst [vmem:[#allocation2 + $0x70] sm:$0xff] 0.0
    %37 = vst [vmem:[#allocation2 + $0x78] sm:$0xff] 0.0
  $region21: #{basic_block_forward.4} parent=0 // pred_fallthru
    _
  %v38 = vld [vmem:[#allocation2] sm:$0xff]
  %v39 = vld [vmem:[#allocation2 + $0x8] sm:$0xff]
  %v40 = vld [vmem:[#allocation2 + $0x10] sm:$0xff]
  %v41 = vld [vmem:[#allocation2 + $0x18] sm:$0xff]
  %v42 = vld [vmem:[#allocation2 + $0x20] sm:$0xff]
  %v43 = vld [vmem:[#allocation2 + $0x28] sm:$0xff]
  %v44 = vld [vmem:[#allocation2 + $0x30] sm:$0xff]
  %v45 = vld [vmem:[#allocation2 + $0x38] sm:$0xff]
  %v46 = vld [vmem:[#allocation2 + $0x40] sm:$0xff]
  %v47 = vld [vmem:[#allocation2 + $0x48] sm:$0xff]
  %v48 = vld [vmem:[#allocation2 + $0x50] sm:$0xff]
  %v49 = vld [vmem:[#allocation2 + $0x58] sm:$0xff]
  %v50 = vld [vmem:[#allocation2 + $0x60] sm:$0xff]
  %v51 = vld [vmem:[#allocation2 + $0x68] sm:$0xff]
  %v52 = vld [vmem:[#allocation2 + $0x70] sm:$0xff]
  %v53 = vld [vmem:[#allocation2 + $0x78] sm:$0xff]
  %v54 = vld [vmem:[%s0] sm:$0xf]
  %v55 = vld [vmem:[%s0 + $0x4] sm:$0xf]
  %v56 = vld [vmem:[%s0 + $0x8] sm:$0xf]
  %v57 = vld [vmem:[%s0 + $0xc] sm:$0xf]
  %v58 = vld [vmem:[%s0 + $0x10] sm:$0xf]
  %v59 = vld [vmem:[%s0 + $0x14] sm:$0xf]
  %v60 = vld [vmem:[%s0 + $0x18] sm:$0xf]
  %v61 = vld [vmem:[%s0 + $0x1c] sm:$0xf]
  %v62 = vld [vmem:[%s0 + $0x20] sm:$0xf]
  %v63 = vld [vmem:[%s0 + $0x24] sm:$0xf]
  %v64 = vld [vmem:[%s0 + $0x28] sm:$0xf]
  %v65 = vld [vmem:[%s0 + $0x2c] sm:$0xf]
  %v66 = vld [vmem:[%s0 + $0x30] sm:$0xf]
  %v67 = vld [vmem:[%s0 + $0x34] sm:$0xf]
  %v68 = vld [vmem:[%s0 + $0x38] sm:$0xf]
  %v69 = vld [vmem:[%s0 + $0x3c] sm:$0xf]
  %v70 = vld [vmem:[%s1] sm:$0xf]
  %v71 = vld [vmem:[%s1 + $0x4] sm:$0xf]
  %v72 = vld [vmem:[%s1 + $0x8] sm:$0xf]
  %v73 = vld [vmem:[%s1 + $0xc] sm:$0xf]
  %v74 = vld [vmem:[%s1 + $0x10] sm:$0xf]
  %v75 = vld [vmem:[%s1 + $0x14] sm:$0xf]
  %v76 = vld [vmem:[%s1 + $0x18] sm:$0xf]
  %v77 = vld [vmem:[%s1 + $0x1c] sm:$0xf]
  %v78 = vld [vmem:[%s1 + $0x20] sm:$0xf]
  %v79 = vld [vmem:[%s1 + $0x24] sm:$0xf]
  %v80 = vld [vmem:[%s1 + $0x28] sm:$0xf]
  %v81 = vld [vmem:[%s1 + $0x2c] sm:$0xf]
  %v82 = vld [vmem:[%s1 + $0x30] sm:$0xf]
  %v83 = vld [vmem:[%s1 + $0x34] sm:$0xf]
  %v84 = vld [vmem:[%s1 + $0x38] sm:$0xf]
  %v85 = vld [vmem:[%s1 + $0x3c] sm:$0xf]
  %v102 = vunpack.c.l.b16 %v54
  %v103 = vunpack.c.l.b16 %v55
  %v104 = vunpack.c.l.b16 %v56
  %v105 = vunpack.c.l.b16 %v57
  %v106 = vunpack.c.l.b16 %v58
  %v107 = vunpack.c.l.b16 %v59
  %v108 = vunpack.c.l.b16 %v60
  %v109 = vunpack.c.l.b16 %v61
  %v110 = vunpack.c.l.b16 %v62
  %v111 = vunpack.c.l.b16 %v63
  %v112 = vunpack.c.l.b16 %v64
  %v113 = vunpack.c.l.b16 %v65
  %v114 = vunpack.c.l.b16 %v66
  %v115 = vunpack.c.l.b16 %v67
  %v116 = vunpack.c.l.b16 %v68
  %v117 = vunpack.c.l.b16 %v69
  %v118 = vpack.c.b16 %v103, %v102
  %v119 = vpack.c.b16 %v105, %v104
  %v120 = vpack.c.b16 %v107, %v106
  %v121 = vpack.c.b16 %v109, %v108
  %v122 = vpack.c.b16 %v111, %v110
  %v123 = vpack.c.b16 %v113, %v112
  %v124 = vpack.c.b16 %v115, %v114
  %v125 = vpack.c.b16 %v117, %v116
  %v150 = vunpack.c.l.b16 %v70
  %v151 = vunpack.c.l.b16 %v71
  %v152 = vunpack.c.l.b16 %v72
  %v153 = vunpack.c.l.b16 %v73
  %v154 = vunpack.c.l.b16 %v74
  %v155 = vunpack.c.l.b16 %v75
  %v156 = vunpack.c.l.b16 %v76
  %v157 = vunpack.c.l.b16 %v77
  %v158 = vunpack.c.l.b16 %v78
  %v159 = vunpack.c.l.b16 %v79
  %v160 = vunpack.c.l.b16 %v80
  %v161 = vunpack.c.l.b16 %v81
  %v162 = vunpack.c.l.b16 %v82
  %v163 = vunpack.c.l.b16 %v83
  %v164 = vunpack.c.l.b16 %v84
  %v165 = vunpack.c.l.b16 %v85
  %v166 = vpack.c.b16 %v151, %v150
  %v167 = vpack.c.b16 %v153, %v152
  %v168 = vpack.c.b16 %v155, %v154
  %v169 = vpack.c.b16 %v157, %v156
  %v170 = vpack.c.b16 %v159, %v158
  %v171 = vpack.c.b16 %v161, %v160
  %v172 = vpack.c.b16 %v163, %v162
  %v173 = vpack.c.b16 %v165, %v164
  %182 = vmatprep.subr.bf16.mxu0 0
  %183 = vmatpush1.bf16.msra.mxu0 %v173
  %184 = vmatprep.subr.bf16.mxu0 0
  %185 = vmatpush1.bf16.msra.mxu0 %v172
  %186 = vmatprep.subr.bf16.mxu0 0
  %187 = vmatpush1.bf16.msra.mxu0 %v171
  %188 = vmatprep.subr.bf16.mxu0 0
  %189 = vmatpush1.bf16.msra.mxu0 %v170
  %190 = vmatprep.subr.bf16.mxu0 0
  %191 = vmatpush1.bf16.msra.mxu0 %v169
  %192 = vmatprep.subr.bf16.mxu0 0
  %193 = vmatpush1.bf16.msra.mxu0 %v168
  %194 = vmatprep.subr.bf16.mxu0 0
  %195 = vmatpush1.bf16.msra.mxu0 %v167
  %196 = vmatprep.subr.bf16.mxu0 0
  %197 = vmatpush1.bf16.msra.mxu0 %v166
  %198 = vmatprep.subr.bf16.mxu0 0
  %199 = vmatpush2.bf16.msra.mxu0 0
  %200 = vmatprep.subr.bf16.mxu0 0
  %201 = vmatpush2.bf16.msra.mxu0 0
  %202 = vmatprep.subr.bf16.mxu0 0
  %203 = vmatpush2.bf16.msra.mxu0 0
  %204 = vmatprep.subr.bf16.mxu0 0
  %205 = vmatpush2.bf16.msra.mxu0 0
  %206 = vmatprep.subr.bf16.mxu0 0
  %207 = vmatpush2.bf16.msra.mxu0 0
  %208 = vmatprep.subr.bf16.mxu0 0
  %209 = vmatpush2.bf16.msra.mxu0 0
  %210 = vmatprep.subr.bf16.mxu0 0
  %211 = vmatpush2.bf16.msra.mxu0 0
  %212 = vmatprep.subr.bf16.mxu0 0
  %213 = vmatpush2.bf16.msra.mxu0 0
  %214 = vmatprep.mubr.bf16.mxu0 0
  %215 = vmatmul.mubr.bf16.gmra.mxu0 %v118
  %v216 = vpop.f32.mrf.mxu0
  %v217 = vadd.f32 0.0, %v216
  %v218 = vpop.f32.mrf.mxu0
  %v219 = vpop.f32.mrf.mxu0
  %v220 = vadd.f32 0.0, %v219
  %v221 = vpop.f32.mrf.mxu0
  %222 = vmatprep.mubr.bf16.mxu0 0
  %223 = vmatmul.mubr.bf16.gmra.mxu0 %v119
  %v224 = vpop.f32.mrf.mxu0
  %v225 = vadd.f32 0.0, %v224
  %v226 = vpop.f32.mrf.mxu0
  %v227 = vpop.f32.mrf.mxu0
  %v228 = vadd.f32 0.0, %v227
  %v229 = vpop.f32.mrf.mxu0
  %230 = vmatprep.mubr.bf16.mxu0 0
  %231 = vmatmul.mubr.bf16.gmra.mxu0 %v120
  %v232 = vpop.f32.mrf.mxu0
  %v233 = vadd.f32 0.0, %v232
  %v234 = vpop.f32.mrf.mxu0
  %v235 = vpop.f32.mrf.mxu0
  %v236 = vadd.f32 0.0, %v235
  %v237 = vpop.f32.mrf.mxu0
  %238 = vmatprep.mubr.bf16.mxu0 0
  %239 = vmatmul.mubr.bf16.gmra.mxu0 %v121
  %v240 = vpop.f32.mrf.mxu0
  %v241 = vadd.f32 0.0, %v240
  %v242 = vpop.f32.mrf.mxu0
  %v243 = vpop.f32.mrf.mxu0
  %v244 = vadd.f32 0.0, %v243
  %v245 = vpop.f32.mrf.mxu0
  %246 = vmatprep.mubr.bf16.mxu0 0
  %247 = vmatmul.mubr.bf16.gmra.mxu0 %v122
  %v248 = vpop.f32.mrf.mxu0
  %v249 = vadd.f32 0.0, %v248
  %v250 = vpop.f32.mrf.mxu0
  %v251 = vpop.f32.mrf.mxu0
  %v252 = vadd.f32 0.0, %v251
  %v253 = vpop.f32.mrf.mxu0
  %254 = vmatprep.mubr.bf16.mxu0 0
  %255 = vmatmul.mubr.bf16.gmra.mxu0 %v123
  %v256 = vpop.f32.mrf.mxu0
  %v257 = vadd.f32 0.0, %v256
  %v258 = vpop.f32.mrf.mxu0
  %v259 = vpop.f32.mrf.mxu0
  %v260 = vadd.f32 0.0, %v259
  %v261 = vpop.f32.mrf.mxu0
  %262 = vmatprep.mubr.bf16.mxu0 0
  %263 = vmatmul.mubr.bf16.gmra.mxu0 %v124
  %v264 = vpop.f32.mrf.mxu0
  %v265 = vadd.f32 0.0, %v264
  %v266 = vpop.f32.mrf.mxu0
  %v267 = vpop.f32.mrf.mxu0
  %v268 = vadd.f32 0.0, %v267
  %v269 = vpop.f32.mrf.mxu0
  %270 = vmatprep.mubr.bf16.mxu0 0
  %271 = vmatmul.mubr.bf16.gmra.mxu0 %v125
  %v272 = vpop.f32.mrf.mxu0
  %v273 = vadd.f32 0.0, %v272
  %v274 = vpop.f32.mrf.mxu0
  %v275 = vpop.f32.mrf.mxu0
  %v276 = vadd.f32 0.0, %v275
  %v277 = vpop.f32.mrf.mxu0
  %278 = vdwg.mxu0
  %v279 = vadd.f32 %v38, %v217
  %v280 = vadd.f32 %v39, %v220
  %v281 = vadd.f32 %v40, %v225
  %v282 = vadd.f32 %v41, %v228
  %v283 = vadd.f32 %v42, %v233
  %v284 = vadd.f32 %v43, %v236
  %v285 = vadd.f32 %v44, %v241
  %v286 = vadd.f32 %v45, %v244
  %v287 = vadd.f32 %v46, %v249
  %v288 = vadd.f32 %v47, %v252
  %v289 = vadd.f32 %v48, %v257
  %v290 = vadd.f32 %v49, %v260
  %v291 = vadd.f32 %v50, %v265
  %v292 = vadd.f32 %v51, %v268
  %v293 = vadd.f32 %v52, %v273
  %v294 = vadd.f32 %v53, %v276
  %295 = vst [vmem:[#allocation2] sm:$0xff] %v279
  %296 = vst [vmem:[#allocation2 + $0x8] sm:$0xff] %v280
  %297 = vst [vmem:[#allocation2 + $0x10] sm:$0xff] %v281
  %298 = vst [vmem:[#allocation2 + $0x18] sm:$0xff] %v282
  %299 = vst [vmem:[#allocation2 + $0x20] sm:$0xff] %v283
  %300 = vst [vmem:[#allocation2 + $0x28] sm:$0xff] %v284
  %301 = vst [vmem:[#allocation2 + $0x30] sm:$0xff] %v285
  %302 = vst [vmem:[#allocation2 + $0x38] sm:$0xff] %v286
  %303 = vst [vmem:[#allocation2 + $0x40] sm:$0xff] %v287
  %304 = vst [vmem:[#allocation2 + $0x48] sm:$0xff] %v288
  %305 = vst [vmem:[#allocation2 + $0x50] sm:$0xff] %v289
  %306 = vst [vmem:[#allocation2 + $0x58] sm:$0xff] %v290
  %307 = vst [vmem:[#allocation2 + $0x60] sm:$0xff] %v291
  %308 = vst [vmem:[#allocation2 + $0x68] sm:$0xff] %v292
  %309 = vst [vmem:[#allocation2 + $0x70] sm:$0xff] %v293
  %310 = vst [vmem:[#allocation2 + $0x78] sm:$0xff] %v294
  // Predicated region
  $region22: #{basic_block_forward.4} parent=0 // pred_check
    %p311 = pneg %p18
  $region23: #{basic_block_forward.4} parent=0 // pred_check_branch
    %313 = sbr.rel (%p311) target = $region25
  $region24: #{basic_block_forward.4} parent=0 // pred_region
    %v314 = vld [vmem:[#allocation2] sm:$0xff]
    %v315 = vld [vmem:[#allocation2 + $0x8] sm:$0xff]
    %v316 = vld [vmem:[#allocation2 + $0x10] sm:$0xff]
    %v317 = vld [vmem:[#allocation2 + $0x18] sm:$0xff]
    %v318 = vld [vmem:[#allocation2 + $0x20] sm:$0xff]
    %v319 = vld [vmem:[#allocation2 + $0x28] sm:$0xff]
    %v320 = vld [vmem:[#allocation2 + $0x30] sm:$0xff]
    %v321 = vld [vmem:[#allocation2 + $0x38] sm:$0xff]
    %v322 = vld [vmem:[#allocation2 + $0x40] sm:$0xff]
    %v323 = vld [vmem:[#allocation2 + $0x48] sm:$0xff]
    %v324 = vld [vmem:[#allocation2 + $0x50] sm:$0xff]
    %v325 = vld [vmem:[#allocation2 + $0x58] sm:$0xff]
    %v326 = vld [vmem:[#allocation2 + $0x60] sm:$0xff]
    %v327 = vld [vmem:[#allocation2 + $0x68] sm:$0xff]
    %v328 = vld [vmem:[#allocation2 + $0x70] sm:$0xff]
    %v329 = vld [vmem:[#allocation2 + $0x78] sm:$0xff]
    %v330 = vld [vmem:[%s2] sm:$0x1]
    %v332 = vlaneseq
    %v333 = vshrl.u32 %v332, 7
    %v334 = vsub.s32 0, %v333
    %v335 = vrot.slane %v330, %v334
    %v337 = vmul.f32 %v314, %v335
    %v338 = vmul.f32 %v315, %v335
    %v339 = vmul.f32 %v316, %v335
    %v340 = vmul.f32 %v317, %v335
    %v341 = vmul.f32 %v318, %v335
    %v342 = vmul.f32 %v319, %v335
    %v343 = vmul.f32 %v320, %v335
    %v344 = vmul.f32 %v321, %v335
    %v345 = vmul.f32 %v322, %v335
    %v346 = vmul.f32 %v323, %v335
    %v347 = vmul.f32 %v324, %v335
    %v348 = vmul.f32 %v325, %v335
    %v349 = vmul.f32 %v326, %v335
    %v350 = vmul.f32 %v327, %v335
    %v351 = vmul.f32 %v328, %v335
    %v352 = vmul.f32 %v329, %v335
    %v353 = vld [vmem:[%s3] sm:$0x1]
    %v355 = vlaneseq
    %v356 = vshrl.u32 %v355, 7
    %v357 = vsub.s32 0, %v356
    %v358 = vrot.slane %v353, %v357
    %v360 = vadd.f32 %v337, %v358
    %v361 = vadd.f32 %v338, %v358
    %v362 = vadd.f32 %v339, %v358
    %v363 = vadd.f32 %v340, %v358
    %v364 = vadd.f32 %v341, %v358
    %v365 = vadd.f32 %v342, %v358
    %v366 = vadd.f32 %v343, %v358
    %v367 = vadd.f32 %v344, %v358
    %v368 = vadd.f32 %v345, %v358
    %v369 = vadd.f32 %v346, %v358
    %v370 = vadd.f32 %v347, %v358
    %v371 = vadd.f32 %v348, %v358
    %v372 = vadd.f32 %v349, %v358
    %v373 = vadd.f32 %v350, %v358
    %v374 = vadd.f32 %v351, %v358
    %v375 = vadd.f32 %v352, %v358
    %376 = vst [vmem:[%s4] sm:$0xff] %v360
    %377 = vst [vmem:[%s4 + $0x8] sm:$0xff] %v361
    %378 = vst [vmem:[%s4 + $0x10] sm:$0xff] %v362
    %379 = vst [vmem:[%s4 + $0x18] sm:$0xff] %v363
    %380 = vst [vmem:[%s4 + $0x20] sm:$0xff] %v364
    %381 = vst [vmem:[%s4 + $0x28] sm:$0xff] %v365
    %382 = vst [vmem:[%s4 + $0x30] sm:$0xff] %v366
    %383 = vst [vmem:[%s4 + $0x38] sm:$0xff] %v367
    %384 = vst [vmem:[%s4 + $0x40] sm:$0xff] %v368
    %385 = vst [vmem:[%s4 + $0x48] sm:$0xff] %v369
    %386 = vst [vmem:[%s4 + $0x50] sm:$0xff] %v370
    %387 = vst [vmem:[%s4 + $0x58] sm:$0xff] %v371
    %388 = vst [vmem:[%s4 + $0x60] sm:$0xff] %v372
    %389 = vst [vmem:[%s4 + $0x68] sm:$0xff] %v373
    %390 = vst [vmem:[%s4 + $0x70] sm:$0xff] %v374
    %391 = vst [vmem:[%s4 + $0x78] sm:$0xff] %v375
  $region25: #{basic_block_forward.4} parent=0 // pred_fallthru
    _
  // Predicated region
  $region26: #{basic_block_forward.4} parent=0 // pred_check
    _
  $region27: #{basic_block_forward.4} parent=0 // pred_check_branch
    %393 = sbr.rel (0) target = $region29
  $region28: #{basic_block_forward.4} parent=0 // pred_region
    _
  $region29: #{basic_block_forward.4} parent=0 // pred_fallthru
    _
  // Predicated region
  $region30: #{basic_block_forward.4} parent=0 // pred_check
    _
  $region31: #{basic_block_forward.4} parent=0 // pred_check_branch
    %395 = sbr.rel (0) target = $region33
  $region32: #{basic_block_forward.4} parent=0 // pred_region
    _
  $region33: #{basic_block_forward.4} parent=0 // pred_fallthru
    _

// kernel: basic_block_forward.5
$region0: #{basic_block_forward.5}
  #allocation0 [shape = 'u32[]', space=smem, size = 0x4, offset = 0x4, fixed_abs, tag = 'smem constant byte address 0x4 - core index']
  #allocation1 [shape = 'u32[144,128]{1,0:T(1,128)}', space=vmem, size = 0x12000, scoped, tag = 'internal scratch']
  #allocation2 [shape = 'f32[128,128]{1,0:T(8,128)}', space=vmem, size = 0x10000, scoped, tag = 'scratch operand']
  %s0 = inlined_call_operand.vmem [shape: bf16[128,128], index: 0, kind: input, shape index: {}]
  %s1 = inlined_call_operand.vmem [shape: bf16[128,128], index: 1, kind: input, shape index: {}]
  %s2 = inlined_call_operand.vmem [shape: f32[1,128], index: 2, kind: input, shape index: {}]
  %s3 = inlined_call_operand.vmem [shape: f32[1,128], index: 3, kind: input, shape index: {}]
  %s4 = inlined_call_operand.vmem [shape: f32[128,128], index: 4, kind: input, shape index: {}]
  %s5 = inlined_call_operand.vmem [shape: f32[128,128], index: 5, kind: output, shape index: {}]
  %s6 = sld [smem:[#allocation0]]
  $region38: #{basic_block_forward.5} parent=0
    _
  %s8 = ssub.s32 1, %s6
  %s9 = scalar_select 0, %s8, %s6
  // Predicated region
  $region2: #{basic_block_forward.5} parent=0 // pred_check
    _
  $region3: #{basic_block_forward.5} parent=0 // pred_check_branch
    %11 = sbr.rel (0) target = $region5
  $region4: #{basic_block_forward.5} parent=0 // pred_region
    _
  $region5: #{basic_block_forward.5} parent=0 // pred_fallthru
    _
  // Predicated region
  $region6: #{basic_block_forward.5} parent=0 // pred_check
    _
  $region7: #{basic_block_forward.5} parent=0 // pred_check_branch
    %13 = sbr.rel (0) target = $region9
  $region8: #{basic_block_forward.5} parent=0 // pred_region
    _
  $region9: #{basic_block_forward.5} parent=0 // pred_fallthru
    _
  // Predicated region
  $region10: #{basic_block_forward.5} parent=0 // pred_check
    _
  $region11: #{basic_block_forward.5} parent=0 // pred_check_branch
    %15 = sbr.rel (0) target = $region13
  $region12: #{basic_block_forward.5} parent=0 // pred_region
    _
  $region13: #{basic_block_forward.5} parent=0 // pred_fallthru
    _
  // Predicated region
  $region14: #{basic_block_forward.5} parent=0 // pred_check
    _
  $region15: #{basic_block_forward.5} parent=0 // pred_check_branch
    %17 = sbr.rel (0) target = $region17
  $region16: #{basic_block_forward.5} parent=0 // pred_region
    _
  $region17: #{basic_block_forward.5} parent=0 // pred_fallthru
    _
  // Predicated region
  $region18: #{basic_block_forward.5} parent=0 // pred_check
    _
  $region19: #{basic_block_forward.5} parent=0 // pred_check_branch
    %19 = sbr.rel (0) target = $region21
  $region20: #{basic_block_forward.5} parent=0 // pred_region
    _
  $region21: #{basic_block_forward.5} parent=0 // pred_fallthru
    _
  %p21 = scmp.eq.s32.totalorder 0, 0
  // Predicated region
  $region22: #{basic_block_forward.5} parent=0 // pred_check
    %p22 = pneg %p21
  $region23: #{basic_block_forward.5} parent=0 // pred_check_branch
    %24 = sbr.rel (%p22) target = $region25
  $region24: #{basic_block_forward.5} parent=0 // pred_region
    %25 = vst [vmem:[#allocation2] sm:$0xff] 0.0
    %26 = vst [vmem:[#allocation2 + $0x8] sm:$0xff] 0.0
    %27 = vst [vmem:[#allocation2 + $0x10] sm:$0xff] 0.0
    %28 = vst [vmem:[#allocation2 + $0x18] sm:$0xff] 0.0
    %29 = vst [vmem:[#allocation2 + $0x20] sm:$0xff] 0.0
    %30 = vst [vmem:[#allocation2 + $0x28] sm:$0xff] 0.0
    %31 = vst [vmem:[#allocation2 + $0x30] sm:$0xff] 0.0
    %32 = vst [vmem:[#allocation2 + $0x38] sm:$0xff] 0.0
    %33 = vst [vmem:[#allocation2 + $0x40] sm:$0xff] 0.0
    %34 = vst [vmem:[#allocation2 + $0x48] sm:$0xff] 0.0
    %35 = vst [vmem:[#allocation2 + $0x50] sm:$0xff] 0.0
    %36 = vst [vmem:[#allocation2 + $0x58] sm:$0xff] 0.0
    %37 = vst [vmem:[#allocation2 + $0x60] sm:$0xff] 0.0
    %38 = vst [vmem:[#allocation2 + $0x68] sm:$0xff] 0.0
    %39 = vst [vmem:[#allocation2 + $0x70] sm:$0xff] 0.0
    %40 = vst [vmem:[#allocation2 + $0x78] sm:$0xff] 0.0
  $region25: #{basic_block_forward.5} parent=0 // pred_fallthru
    _
  %v41 = vld [vmem:[#allocation2] sm:$0xff]
  %v42 = vld [vmem:[#allocation2 + $0x8] sm:$0xff]
  %v43 = vld [vmem:[#allocation2 + $0x10] sm:$0xff]
  %v44 = vld [vmem:[#allocation2 + $0x18] sm:$0xff]
  %v45 = vld [vmem:[#allocation2 + $0x20] sm:$0xff]
  %v46 = vld [vmem:[#allocation2 + $0x28] sm:$0xff]
  %v47 = vld [vmem:[#allocation2 + $0x30] sm:$0xff]
  %v48 = vld [vmem:[#allocation2 + $0x38] sm:$0xff]
  %v49 = vld [vmem:[#allocation2 + $0x40] sm:$0xff]
  %v50 = vld [vmem:[#allocation2 + $0x48] sm:$0xff]
  %v51 = vld [vmem:[#allocation2 + $0x50] sm:$0xff]
  %v52 = vld [vmem:[#allocation2 + $0x58] sm:$0xff]
  %v53 = vld [vmem:[#allocation2 + $0x60] sm:$0xff]
  %v54 = vld [vmem:[#allocation2 + $0x68] sm:$0xff]
  %v55 = vld [vmem:[#allocation2 + $0x70] sm:$0xff]
  %v56 = vld [vmem:[#allocation2 + $0x78] sm:$0xff]
  %v57 = vld [vmem:[%s0] sm:$0xf]
  %v58 = vld [vmem:[%s0 + $0x4] sm:$0xf]
  %v59 = vld [vmem:[%s0 + $0x8] sm:$0xf]
  %v60 = vld [vmem:[%s0 + $0xc] sm:$0xf]
  %v61 = vld [vmem:[%s0 + $0x10] sm:$0xf]
  %v62 = vld [vmem:[%s0 + $0x14] sm:$0xf]
  %v63 = vld [vmem:[%s0 + $0x18] sm:$0xf]
  %v64 = vld [vmem:[%s0 + $0x1c] sm:$0xf]
  %v65 = vld [vmem:[%s0 + $0x20] sm:$0xf]
  %v66 = vld [vmem:[%s0 + $0x24] sm:$0xf]
  %v67 = vld [vmem:[%s0 + $0x28] sm:$0xf]
  %v68 = vld [vmem:[%s0 + $0x2c] sm:$0xf]
  %v69 = vld [vmem:[%s0 + $0x30] sm:$0xf]
  %v70 = vld [vmem:[%s0 + $0x34] sm:$0xf]
  %v71 = vld [vmem:[%s0 + $0x38] sm:$0xf]
  %v72 = vld [vmem:[%s0 + $0x3c] sm:$0xf]
  %v73 = vld [vmem:[%s1] sm:$0xf]
  %v74 = vld [vmem:[%s1 + $0x4] sm:$0xf]
  %v75 = vld [vmem:[%s1 + $0x8] sm:$0xf]
  %v76 = vld [vmem:[%s1 + $0xc] sm:$0xf]
  %v77 = vld [vmem:[%s1 + $0x10] sm:$0xf]
  %v78 = vld [vmem:[%s1 + $0x14] sm:$0xf]
  %v79 = vld [vmem:[%s1 + $0x18] sm:$0xf]
  %v80 = vld [vmem:[%s1 + $0x1c] sm:$0xf]
  %v81 = vld [vmem:[%s1 + $0x20] sm:$0xf]
  %v82 = vld [vmem:[%s1 + $0x24] sm:$0xf]
  %v83 = vld [vmem:[%s1 + $0x28] sm:$0xf]
  %v84 = vld [vmem:[%s1 + $0x2c] sm:$0xf]
  %v85 = vld [vmem:[%s1 + $0x30] sm:$0xf]
  %v86 = vld [vmem:[%s1 + $0x34] sm:$0xf]
  %v87 = vld [vmem:[%s1 + $0x38] sm:$0xf]
  %v88 = vld [vmem:[%s1 + $0x3c] sm:$0xf]
  %v105 = vunpack.c.l.b16 %v57
  %v106 = vunpack.c.l.b16 %v58
  %v107 = vunpack.c.l.b16 %v59
  %v108 = vunpack.c.l.b16 %v60
  %v109 = vunpack.c.l.b16 %v61
  %v110 = vunpack.c.l.b16 %v62
  %v111 = vunpack.c.l.b16 %v63
  %v112 = vunpack.c.l.b16 %v64
  %v113 = vunpack.c.l.b16 %v65
  %v114 = vunpack.c.l.b16 %v66
  %v115 = vunpack.c.l.b16 %v67
  %v116 = vunpack.c.l.b16 %v68
  %v117 = vunpack.c.l.b16 %v69
  %v118 = vunpack.c.l.b16 %v70
  %v119 = vunpack.c.l.b16 %v71
  %v120 = vunpack.c.l.b16 %v72
  %v121 = vpack.c.b16 %v106, %v105
  %v122 = vpack.c.b16 %v108, %v107
  %v123 = vpack.c.b16 %v110, %v109
  %v124 = vpack.c.b16 %v112, %v111
  %v125 = vpack.c.b16 %v114, %v113
  %v126 = vpack.c.b16 %v116, %v115
  %v127 = vpack.c.b16 %v118, %v117
  %v128 = vpack.c.b16 %v120, %v119
  %v153 = vunpack.c.l.b16 %v73
  %v154 = vunpack.c.l.b16 %v74
  %v155 = vunpack.c.l.b16 %v75
  %v156 = vunpack.c.l.b16 %v76
  %v157 = vunpack.c.l.b16 %v77
  %v158 = vunpack.c.l.b16 %v78
  %v159 = vunpack.c.l.b16 %v79
  %v160 = vunpack.c.l.b16 %v80
  %v161 = vunpack.c.l.b16 %v81
  %v162 = vunpack.c.l.b16 %v82
  %v163 = vunpack.c.l.b16 %v83
  %v164 = vunpack.c.l.b16 %v84
  %v165 = vunpack.c.l.b16 %v85
  %v166 = vunpack.c.l.b16 %v86
  %v167 = vunpack.c.l.b16 %v87
  %v168 = vunpack.c.l.b16 %v88
  %v169 = vpack.c.b16 %v154, %v153
  %v170 = vpack.c.b16 %v156, %v155
  %v171 = vpack.c.b16 %v158, %v157
  %v172 = vpack.c.b16 %v160, %v159
  %v173 = vpack.c.b16 %v162, %v161
  %v174 = vpack.c.b16 %v164, %v163
  %v175 = vpack.c.b16 %v166, %v165
  %v176 = vpack.c.b16 %v168, %v167
  %185 = vmatprep.subr.bf16.mxu0 0
  %186 = vmatpush1.bf16.msra.mxu0 %v176
  %187 = vmatprep.subr.bf16.mxu0 0
  %188 = vmatpush1.bf16.msra.mxu0 %v175
  %189 = vmatprep.subr.bf16.mxu0 0
  %190 = vmatpush1.bf16.msra.mxu0 %v174
  %191 = vmatprep.subr.bf16.mxu0 0
  %192 = vmatpush1.bf16.msra.mxu0 %v173
  %193 = vmatprep.subr.bf16.mxu0 0
  %194 = vmatpush1.bf16.msra.mxu0 %v172
  %195 = vmatprep.subr.bf16.mxu0 0
  %196 = vmatpush1.bf16.msra.mxu0 %v171
  %197 = vmatprep.subr.bf16.mxu0 0
  %198 = vmatpush1.bf16.msra.mxu0 %v170
  %199 = vmatprep.subr.bf16.mxu0 0
  %200 = vmatpush1.bf16.msra.mxu0 %v169
  %201 = vmatprep.subr.bf16.mxu0 0
  %202 = vmatpush2.bf16.msra.mxu0 0
  %203 = vmatprep.subr.bf16.mxu0 0
  %204 = vmatpush2.bf16.msra.mxu0 0
  %205 = vmatprep.subr.bf16.mxu0 0
  %206 = vmatpush2.bf16.msra.mxu0 0
  %207 = vmatprep.subr.bf16.mxu0 0
  %208 = vmatpush2.bf16.msra.mxu0 0
  %209 = vmatprep.subr.bf16.mxu0 0
  %210 = vmatpush2.bf16.msra.mxu0 0
  %211 = vmatprep.subr.bf16.mxu0 0
  %212 = vmatpush2.bf16.msra.mxu0 0
  %213 = vmatprep.subr.bf16.mxu0 0
  %214 = vmatpush2.bf16.msra.mxu0 0
  %215 = vmatprep.subr.bf16.mxu0 0
  %216 = vmatpush2.bf16.msra.mxu0 0
  %217 = vmatprep.mubr.bf16.mxu0 0
  %218 = vmatmul.mubr.bf16.gmra.mxu0 %v121
  %v219 = vpop.f32.mrf.mxu0
  %v220 = vadd.f32 0.0, %v219
  %v221 = vpop.f32.mrf.mxu0
  %v222 = vpop.f32.mrf.mxu0
  %v223 = vadd.f32 0.0, %v222
  %v224 = vpop.f32.mrf.mxu0
  %225 = vmatprep.mubr.bf16.mxu0 0
  %226 = vmatmul.mubr.bf16.gmra.mxu0 %v122
  %v227 = vpop.f32.mrf.mxu0
  %v228 = vadd.f32 0.0, %v227
  %v229 = vpop.f32.mrf.mxu0
  %v230 = vpop.f32.mrf.mxu0
  %v231 = vadd.f32 0.0, %v230
  %v232 = vpop.f32.mrf.mxu0
  %233 = vmatprep.mubr.bf16.mxu0 0
  %234 = vmatmul.mubr.bf16.gmra.mxu0 %v123
  %v235 = vpop.f32.mrf.mxu0
  %v236 = vadd.f32 0.0, %v235
  %v237 = vpop.f32.mrf.mxu0
  %v238 = vpop.f32.mrf.mxu0
  %v239 = vadd.f32 0.0, %v238
  %v240 = vpop.f32.mrf.mxu0
  %241 = vmatprep.mubr.bf16.mxu0 0
  %242 = vmatmul.mubr.bf16.gmra.mxu0 %v124
  %v243 = vpop.f32.mrf.mxu0
  %v244 = vadd.f32 0.0, %v243
  %v245 = vpop.f32.mrf.mxu0
  %v246 = vpop.f32.mrf.mxu0
  %v247 = vadd.f32 0.0, %v246
  %v248 = vpop.f32.mrf.mxu0
  %249 = vmatprep.mubr.bf16.mxu0 0
  %250 = vmatmul.mubr.bf16.gmra.mxu0 %v125
  %v251 = vpop.f32.mrf.mxu0
  %v252 = vadd.f32 0.0, %v251
  %v253 = vpop.f32.mrf.mxu0
  %v254 = vpop.f32.mrf.mxu0
  %v255 = vadd.f32 0.0, %v254
  %v256 = vpop.f32.mrf.mxu0
  %257 = vmatprep.mubr.bf16.mxu0 0
  %258 = vmatmul.mubr.bf16.gmra.mxu0 %v126
  %v259 = vpop.f32.mrf.mxu0
  %v260 = vadd.f32 0.0, %v259
  %v261 = vpop.f32.mrf.mxu0
  %v262 = vpop.f32.mrf.mxu0
  %v263 = vadd.f32 0.0, %v262
  %v264 = vpop.f32.mrf.mxu0
  %265 = vmatprep.mubr.bf16.mxu0 0
  %266 = vmatmul.mubr.bf16.gmra.mxu0 %v127
  %v267 = vpop.f32.mrf.mxu0
  %v268 = vadd.f32 0.0, %v267
  %v269 = vpop.f32.mrf.mxu0
  %v270 = vpop.f32.mrf.mxu0
  %v271 = vadd.f32 0.0, %v270
  %v272 = vpop.f32.mrf.mxu0
  %273 = vmatprep.mubr.bf16.mxu0 0
  %274 = vmatmul.mubr.bf16.gmra.mxu0 %v128
  %v275 = vpop.f32.mrf.mxu0
  %v276 = vadd.f32 0.0, %v275
  %v277 = vpop.f32.mrf.mxu0
  %v278 = vpop.f32.mrf.mxu0
  %v279 = vadd.f32 0.0, %v278
  %v280 = vpop.f32.mrf.mxu0
  %281 = vdwg.mxu0
  %v282 = vadd.f32 %v41, %v220
  %v283 = vadd.f32 %v42, %v223
  %v284 = vadd.f32 %v43, %v228
  %v285 = vadd.f32 %v44, %v231
  %v286 = vadd.f32 %v45, %v236
  %v287 = vadd.f32 %v46, %v239
  %v288 = vadd.f32 %v47, %v244
  %v289 = vadd.f32 %v48, %v247
  %v290 = vadd.f32 %v49, %v252
  %v291 = vadd.f32 %v50, %v255
  %v292 = vadd.f32 %v51, %v260
  %v293 = vadd.f32 %v52, %v263
  %v294 = vadd.f32 %v53, %v268
  %v295 = vadd.f32 %v54, %v271
  %v296 = vadd.f32 %v55, %v276
  %v297 = vadd.f32 %v56, %v279
  %298 = vst [vmem:[#allocation2] sm:$0xff] %v282
  %299 = vst [vmem:[#allocation2 + $0x8] sm:$0xff] %v283
  %300 = vst [vmem:[#allocation2 + $0x10] sm:$0xff] %v284
  %301 = vst [vmem:[#allocation2 + $0x18] sm:$0xff] %v285
  %302 = vst [vmem:[#allocation2 + $0x20] sm:$0xff] %v286
  %303 = vst [vmem:[#allocation2 + $0x28] sm:$0xff] %v287
  %304 = vst [vmem:[#allocation2 + $0x30] sm:$0xff] %v288
  %305 = vst [vmem:[#allocation2 + $0x38] sm:$0xff] %v289
  %306 = vst [vmem:[#allocation2 + $0x40] sm:$0xff] %v290
  %307 = vst [vmem:[#allocation2 + $0x48] sm:$0xff] %v291
  %308 = vst [vmem:[#allocation2 + $0x50] sm:$0xff] %v292
  %309 = vst [vmem:[#allocation2 + $0x58] sm:$0xff] %v293
  %310 = vst [vmem:[#allocation2 + $0x60] sm:$0xff] %v294
  %311 = vst [vmem:[#allocation2 + $0x68] sm:$0xff] %v295
  %312 = vst [vmem:[#allocation2 + $0x70] sm:$0xff] %v296
  %313 = vst [vmem:[#allocation2 + $0x78] sm:$0xff] %v297
  // Predicated region
  $region26: #{basic_block_forward.5} parent=0 // pred_check
    %p314 = pneg %p21
  $region27: #{basic_block_forward.5} parent=0 // pred_check_branch
    %316 = sbr.rel (%p314) target = $region29
  $region28: #{basic_block_forward.5} parent=0 // pred_region
    %v317 = vld [vmem:[#allocation2] sm:$0xff]
    %v318 = vld [vmem:[#allocation2 + $0x8] sm:$0xff]
    %v319 = vld [vmem:[#allocation2 + $0x10] sm:$0xff]
    %v320 = vld [vmem:[#allocation2 + $0x18] sm:$0xff]
    %v321 = vld [vmem:[#allocation2 + $0x20] sm:$0xff]
    %v322 = vld [vmem:[#allocation2 + $0x28] sm:$0xff]
    %v323 = vld [vmem:[#allocation2 + $0x30] sm:$0xff]
    %v324 = vld [vmem:[#allocation2 + $0x38] sm:$0xff]
    %v325 = vld [vmem:[#allocation2 + $0x40] sm:$0xff]
    %v326 = vld [vmem:[#allocation2 + $0x48] sm:$0xff]
    %v327 = vld [vmem:[#allocation2 + $0x50] sm:$0xff]
    %v328 = vld [vmem:[#allocation2 + $0x58] sm:$0xff]
    %v329 = vld [vmem:[#allocation2 + $0x60] sm:$0xff]
    %v330 = vld [vmem:[#allocation2 + $0x68] sm:$0xff]
    %v331 = vld [vmem:[#allocation2 + $0x70] sm:$0xff]
    %v332 = vld [vmem:[#allocation2 + $0x78] sm:$0xff]
    %v333 = vld [vmem:[%s2] sm:$0x1]
    %v335 = vlaneseq
    %v336 = vshrl.u32 %v335, 7
    %v337 = vsub.s32 0, %v336
    %v338 = vrot.slane %v333, %v337
    %v340 = vmul.f32 %v317, %v338
    %v341 = vmul.f32 %v318, %v338
    %v342 = vmul.f32 %v319, %v338
    %v343 = vmul.f32 %v320, %v338
    %v344 = vmul.f32 %v321, %v338
    %v345 = vmul.f32 %v322, %v338
    %v346 = vmul.f32 %v323, %v338
    %v347 = vmul.f32 %v324, %v338
    %v348 = vmul.f32 %v325, %v338
    %v349 = vmul.f32 %v326, %v338
    %v350 = vmul.f32 %v327, %v338
    %v351 = vmul.f32 %v328, %v338
    %v352 = vmul.f32 %v329, %v338
    %v353 = vmul.f32 %v330, %v338
    %v354 = vmul.f32 %v331, %v338
    %v355 = vmul.f32 %v332, %v338
    %v356 = vld [vmem:[%s3] sm:$0x1]
    %v358 = vlaneseq
    %v359 = vshrl.u32 %v358, 7
    %v360 = vsub.s32 0, %v359
    %v361 = vrot.slane %v356, %v360
    %v363 = vadd.f32 %v340, %v361
    %v364 = vadd.f32 %v341, %v361
    %v365 = vadd.f32 %v342, %v361
    %v366 = vadd.f32 %v343, %v361
    %v367 = vadd.f32 %v344, %v361
    %v368 = vadd.f32 %v345, %v361
    %v369 = vadd.f32 %v346, %v361
    %v370 = vadd.f32 %v347, %v361
    %v371 = vadd.f32 %v348, %v361
    %v372 = vadd.f32 %v349, %v361
    %v373 = vadd.f32 %v350, %v361
    %v374 = vadd.f32 %v351, %v361
    %v375 = vadd.f32 %v352, %v361
    %v376 = vadd.f32 %v353, %v361
    %v377 = vadd.f32 %v354, %v361
    %v378 = vadd.f32 %v355, %v361
    %v379 = vld [vmem:[%s4] sm:$0xff]
    %v380 = vld [vmem:[%s4 + $0x8] sm:$0xff]
    %v381 = vld [vmem:[%s4 + $0x10] sm:$0xff]
    %v382 = vld [vmem:[%s4 + $0x18] sm:$0xff]
    %v383 = vld [vmem:[%s4 + $0x20] sm:$0xff]
    %v384 = vld [vmem:[%s4 + $0x28] sm:$0xff]
    %v385 = vld [vmem:[%s4 + $0x30] sm:$0xff]
    %v386 = vld [vmem:[%s4 + $0x38] sm:$0xff]
    %v387 = vld [vmem:[%s4 + $0x40] sm:$0xff]
    %v388 = vld [vmem:[%s4 + $0x48] sm:$0xff]
    %v389 = vld [vmem:[%s4 + $0x50] sm:$0xff]
    %v390 = vld [vmem:[%s4 + $0x58] sm:$0xff]
    %v391 = vld [vmem:[%s4 + $0x60] sm:$0xff]
    %v392 = vld [vmem:[%s4 + $0x68] sm:$0xff]
    %v393 = vld [vmem:[%s4 + $0x70] sm:$0xff]
    %v394 = vld [vmem:[%s4 + $0x78] sm:$0xff]
    %v395 = vadd.f32 %v363, %v379
    %v396 = vadd.f32 %v364, %v380
    %v397 = vadd.f32 %v365, %v381
    %v398 = vadd.f32 %v366, %v382
    %v399 = vadd.f32 %v367, %v383
    %v400 = vadd.f32 %v368, %v384
    %v401 = vadd.f32 %v369, %v385
    %v402 = vadd.f32 %v370, %v386
    %v403 = vadd.f32 %v371, %v387
    %v404 = vadd.f32 %v372, %v388
    %v405 = vadd.f32 %v373, %v389
    %v406 = vadd.f32 %v374, %v390
    %v407 = vadd.f32 %v375, %v391
    %v408 = vadd.f32 %v376, %v392
    %v409 = vadd.f32 %v377, %v393
    %v410 = vadd.f32 %v378, %v394
    %v411 = vmax.f32 %v395, 0.0
    %v412 = vmax.f32 %v396, 0.0
    %v413 = vmax.f32 %v397, 0.0
    %v414 = vmax.f32 %v398, 0.0
    %v415 = vmax.f32 %v399, 0.0
    %v416 = vmax.f32 %v400, 0.0
    %v417 = vmax.f32 %v401, 0.0
    %v418 = vmax.f32 %v402, 0.0
    %v419 = vmax.f32 %v403, 0.0
    %v420 = vmax.f32 %v404, 0.0
    %v421 = vmax.f32 %v405, 0.0
    %v422 = vmax.f32 %v406, 0.0
    %v423 = vmax.f32 %v407, 0.0
    %v424 = vmax.f32 %v408, 0.0
    %v425 = vmax.f32 %v409, 0.0
    %v426 = vmax.f32 %v410, 0.0
    %427 = vst [vmem:[%s5] sm:$0xff] %v411
    %428 = vst [vmem:[%s5 + $0x8] sm:$0xff] %v412
    %429 = vst [vmem:[%s5 + $0x10] sm:$0xff] %v413
    %430 = vst [vmem:[%s5 + $0x18] sm:$0xff] %v414
    %431 = vst [vmem:[%s5 + $0x20] sm:$0xff] %v415
    %432 = vst [vmem:[%s5 + $0x28] sm:$0xff] %v416
    %433 = vst [vmem:[%s5 + $0x30] sm:$0xff] %v417
    %434 = vst [vmem:[%s5 + $0x38] sm:$0xff] %v418
    %435 = vst [vmem:[%s5 + $0x40] sm:$0xff] %v419
    %436 = vst [vmem:[%s5 + $0x48] sm:$0xff] %v420
    %437 = vst [vmem:[%s5 + $0x50] sm:$0xff] %v421
    %438 = vst [vmem:[%s5 + $0x58] sm:$0xff] %v422
    %439 = vst [vmem:[%s5 + $0x60] sm:$0xff] %v423
    %440 = vst [vmem:[%s5 + $0x68] sm:$0xff] %v424
    %441 = vst [vmem:[%s5 + $0x70] sm:$0xff] %v425
    %442 = vst [vmem:[%s5 + $0x78] sm:$0xff] %v426
  $region29: #{basic_block_forward.5} parent=0 // pred_fallthru
    _
  // Predicated region
  $region30: #{basic_block_forward.5} parent=0 // pred_check
    _
  $region31: #{basic_block_forward.5} parent=0 // pred_check_branch
    %444 = sbr.rel (0) target = $region33
  $region32: #{basic_block_forward.5} parent=0 // pred_region
    _
  $region33: #{basic_block_forward.5} parent=0 // pred_fallthru
    _
  // Predicated region
  $region34: #{basic_block_forward.5} parent=0 // pred_check
    _
  $region35: #{basic_block_forward.5} parent=0 // pred_check_branch
    %446 = sbr.rel (0) target = $region37
  $region36: #{basic_block_forward.5} parent=0 // pred_region
    _
  $region37: #{basic_block_forward.5} parent=0 // pred_fallthru
    _

</llo_original>
